<compile_context>
chip_gen: v7x
topology: tpu7x:2x2x1
jax: 0.10.0
libtpu: 0.0.40
codegen_flags: <defaults>
</compile_context>

<pallas_src>
import jax
import jax.numpy as jnp
from jax import lax
from jax.experimental import pallas as pl
from jax.experimental.pallas import tpu as pltpu


MATMUL_DTYPE = jnp.bfloat16   # MXU operand dtype (f32 accumulation everywhere)


# ----------------------------- small helpers --------------------------------
def _mm(a, b):
    """MXU matmul: bf16 operands, f32 accumulation."""
    return jnp.dot(a.astype(MATMUL_DTYPE), b.astype(MATMUL_DTYPE),
                   preferred_element_type=jnp.float32)


def _mm_nt(a, b):
    """a @ b.T without materializing b.T (contraction over the last dims)."""
    return lax.dot_general(a.astype(MATMUL_DTYPE), b.astype(MATMUL_DTYPE),
                           (((1,), (1,)), ((), ())),
                           preferred_element_type=jnp.float32)


def _layer_norm(x, g, b, eps=1e-5):   # eps matches torch nn.LayerNorm default
    mu = jnp.mean(x, axis=-1, keepdims=True)
    var = jnp.mean((x - mu) ** 2, axis=-1, keepdims=True)
    return (x - mu) * lax.rsqrt(var + eps) * g + b


def _gelu(x):
    # tanh-approximate GELU (assumed encoder activation).
    return 0.5 * x * (1.0 + jnp.tanh(0.7978845608028654 * (x + 0.044715 * x * x * x)))


# ------------------------------- the kernel ---------------------------------
def model_wrapper_kernel(
    d_ref,       # (1, Bt, T_in*OD) f32  raw data sequences (time column hoisted out)
    temb_ref,    # (Bt*T_in, H)     f32  tiled t_input ⊗ w_emb[0] + b_emb (batch-invariant)
    cq_ref,      # (Bt*T_out, H)    f32  tiled scaled cross-attn query (batch-invariant)
    mask_s_ref,  # (Bt*T_in,  Bt*T_in) f32  block-diagonal additive mask (self-attn)
    mask_c_ref,  # (Bt*T_out, Bt*T_in) f32  block-diagonal additive mask (cross-attn)
    w_emb_d,     # (OD, H)     bf16  data columns of embedder weight
    wqkv,        # (H, 3*SEG)  bf16  fused self-attn projections, 128-lane padded segments
    wo,          # (H, H)      bf16
    w_ff1,       # (H, FFN)    bf16
    b_ff1,       # (1, FFN)    f32
    w_ff2,       # (FFN, H)    bf16
    w_ckv,       # (H, 2*SEG)  bf16  fused cross-attn K/V, 128-lane padded segments
    w_out,       # (H, OD)     bf16
    vecs_ref,    # (8, H)      f32   packed [bo, ln1_g, ln1_b, b_ff2, ln2_g, ln2_b, b_out(pad), 0]
    o_ref,       # (1, Bt, T_out*OD)
):
    eps_n = jnp.float32(1e-6)
    _, Bt, TD = d_ref.shape
    OD = w_emb_d.shape[0]
    T_in = TD // OD
    Mq, H = cq_ref.shape
    M = Bt * T_in
    T_out = Mq // Bt
    SEG = wqkv.shape[1] // 3       # 128-lane-aligned segment width (>= H)
    SEG2 = w_ckv.shape[1] // 2

    vec = vecs_ref[...]
    bo, ln1_g, ln1_b = vec[0:1], vec[1:2], vec[2:3]
    b_ff2, ln2_g, ln2_b = vec[3:4], vec[4:5], vec[5:6]
    b_out = vec[6:7, :OD]

    # ---------------- normalizer (forward): per-sequence data-channel stats ---
    d = d_ref[0].reshape(Bt, T_in, OD)                         # (Bt, T_in, OD) f32
    mu = jnp.mean(d, axis=1, keepdims=True)                    # (Bt, 1, OD)
    var = jnp.mean((d - mu) ** 2, axis=1, keepdims=True)       # (Bt, 1, OD)
    dn = (d - mu) * lax.rsqrt(var + eps_n)

    # ---------------- embedder (flattened to M = Bt*T_in rows) ----------------
    h = _mm(dn.reshape(M, OD), w_emb_d[...]) + temb_ref[...]   # (M, H)

    # ---------------- data_encoder ('fwd'): 1-layer transformer encoder -------
    qkv = _mm(h, wqkv[...])                                    # (M, 3*SEG) one fused matmul
    q = qkv[:, :H]                                             # scale pre-folded into wq
    k = qkv[:, SEG:SEG + H]
    v = qkv[:, 2 * SEG:2 * SEG + H]

    # block-diagonal (per-sequence) self-attention as one flat matmul
    s = _mm_nt(q, k) + mask_s_ref[...]                         # (M, M)
    s = s - jnp.max(s, axis=-1, keepdims=True)
    p = jnp.exp(s)
    a = p * pl.reciprocal(jnp.sum(p, axis=-1, keepdims=True), approx=True)
    attn = _mm(_mm(a, v), wo[...]) + bo                        # (M, H)
    h = _layer_norm(h + attn, ln1_g, ln1_b)

    f = _gelu(_mm(h, w_ff1[...]) + b_ff1[...])
    f = _mm(f, w_ff2[...]) + b_ff2
    h = _layer_norm(h + f, ln2_g, ln2_b)
    # fused_features = data_encoded.transpose(0, 1)  -> layout-only; tile is `h`

    # ---------------- data_decoder.generate: flat cross-attention decode ------
    ckv = _mm(h, w_ckv[...])                                   # (M, 2*SEG) one fused matmul
    ck = ckv[:, :H]
    cv = ckv[:, SEG2:SEG2 + H]

    cs = _mm_nt(cq_ref[...], ck) + mask_c_ref[...]             # (Bt*T_out, M), scale pre-folded
    cs = cs - jnp.max(cs, axis=-1, keepdims=True)
    cp = jnp.exp(cs)
    ca = cp * pl.reciprocal(jnp.sum(cp, axis=-1, keepdims=True), approx=True)
    ctx = _mm(ca, cv)                                          # (Bt*T_out, H)
    pred = _mm(ctx, w_out[...]) + b_out                        # (Bt*T_out, OD)

    # ---------------- normalizer.reverse + lane-dense writeback ----------------
    std_d = jnp.sqrt(var + eps_n)                              # (Bt, 1, OD)
    out = pred.reshape(Bt, T_out, OD) * std_d + mu             # (Bt, T_out, OD)
    o_ref[0] = out.reshape(Bt, T_out * OD).astype(o_ref.dtype)


# ------------------------------- wrapper -------------------------------------
def init_params(key, output_dim, hidden, ffn):
    f = output_dim + 1
    shapes = {
        "w_emb": (f, hidden), "b_emb": (1, hidden),
        "wq": (hidden, hidden), "wk": (hidden, hidden), "wv": (hidden, hidden),
        "wo": (hidden, hidden), "bo": (1, hidden),
        "ln1_g": (1, hidden), "ln1_b": (1, hidden),
        "w_ff1": (hidden, ffn), "b_ff1": (1, ffn),
        "w_ff2": (ffn, hidden), "b_ff2": (1, hidden),
        "ln2_g": (1, hidden), "ln2_b": (1, hidden),
        "w_qt": (1, hidden), "b_qt": (1, hidden),
        "w_cq": (hidden, hidden), "w_ck": (hidden, hidden), "w_cv": (hidden, hidden),
        "w_out": (hidden, output_dim), "b_out": (1, output_dim),
    }
    params = {}
    keys = jax.random.split(key, len(shapes))
    for k_, (name, shp) in zip(keys, shapes.items()):
        if name.startswith("b_") or name.endswith("_b") or name == "bo":
            params[name] = jnp.zeros(shp, jnp.float32)
        elif name.endswith("_g"):
            params[name] = jnp.ones(shp, jnp.float32)
        else:
            params[name] = (0.1 * jax.random.normal(k_, shp)).astype(jnp.float32)
    return params


def _choose_bt(B, T_in):
    """Batch-fold factor: target M = Bt*T_in >= 128 for MXU fill, but always
    keep >= 2 grid steps when B >= 2 so both v7x TensorCores get work."""
    target = max(1, -(-128 // T_in))          # ceil(128 / T_in)
    bt = min(B, target)
    while B % bt != 0:
        bt -= 1
    if B >= 2 and B // bt < 2:                # force a >=2-step grid for megacore
        bt = max(1, B // 2)
        while B % bt != 0:
            bt -= 1
    return bt


@jax.jit
def model_wrapper_forward(data_input, t_input, query_times, params):
    """data_input: (B, T_in, output_dim); returns data_outputs (B, T_out, output_dim)."""
    B, T_in, OD = data_input.shape
    T_out = query_times.shape[0]
    H = params["wq"].shape[0]
    FFN = params["w_ff1"].shape[1]
    assert H >= OD

    Bt = _choose_bt(B, T_in)
    G = B // Bt
    M = Bt * T_in
    Mq = Bt * T_out
    SEG = ((H + 127) // 128) * 128            # 128-lane-aligned segment width
    scale = 1.0 / jnp.sqrt(jnp.float32(H))

    # ---- hoisted batch-invariant precompute (tiny, plain XLA) ----
    # time-column embedder contribution + bias (outer product, no concat needed)
    temb = (t_input[:, None].astype(jnp.float32) * params["w_emb"][0:1, :]
            + params["b_emb"])                                        # (T_in, H)
    temb_tiled = jnp.tile(temb, (Bt, 1))                              # (M, H)
    # data_decoder('query_emb', query_times), its cross-attn query projection,
    # with the 1/sqrt(H) attention scale folded in
    qe = jnp.tanh(query_times[:, None].astype(jnp.float32) * params["w_qt"]
                  + params["b_qt"])                                   # (T_out, H)
    cq = jnp.dot(qe, params["w_cq"]) * scale                          # (T_out, H)
    cq_tiled = jnp.tile(cq, (Bt, 1))                                  # (Mq, H)

    # ---- block-diagonal additive masks (0 on-block, -1e30 off-block) ----
    neg = jnp.float32(-1e30)
    seq_s = jnp.arange(M, dtype=jnp.int32) // T_in
    seq_q = jnp.arange(Mq, dtype=jnp.int32) // T_out
    mask_s = jnp.where(seq_s[:, None] == seq_s[None, :], 0.0, neg).astype(jnp.float32)
    mask_c = jnp.where(seq_q[:, None] == seq_s[None, :], 0.0, neg).astype(jnp.float32)

    # ---- fused / padded weights (bf16 MXU operands, f32 biases) ----
    def pad_cols(w):  # zero-pad columns so each fused segment starts on a lane tile
        return jnp.zeros((H, SEG), w.dtype).at[:, :w.shape[1]].set(w)

    w_emb_d = params["w_emb"][1:].astype(MATMUL_DTYPE)                # (OD, H)
    wqkv = jnp.concatenate([pad_cols(params["wq"] * scale),           # scale folded into wq
                            pad_cols(params["wk"]),
                            pad_cols(params["wv"])],
                           axis=1).astype(MATMUL_DTYPE)               # (H, 3*SEG)
    wo = params["wo"].astype(MATMUL_DTYPE)
    w_ff1 = params["w_ff1"].astype(MATMUL_DTYPE)
    b_ff1 = params["b_ff1"]
    w_ff2 = params["w_ff2"].astype(MATMUL_DTYPE)
    w_ckv = jnp.concatenate([pad_cols(params["w_ck"]),
                             pad_cols(params["w_cv"])],
                            axis=1).astype(MATMUL_DTYPE)              # (H, 2*SEG)
    w_out = params["w_out"].astype(MATMUL_DTYPE)

    b_out_pad = jnp.zeros((1, H), jnp.float32).at[:, :OD].set(params["b_out"])
    vecs = jnp.concatenate([
        params["bo"], params["ln1_g"], params["ln1_b"], params["b_ff2"],
        params["ln2_g"], params["ln2_b"], b_out_pad,
        jnp.zeros((1, H), jnp.float32),
    ], axis=0)                                                        # (8, H)

    # ---- lane-dense I/O layout: (G, Bt, T*OD) full blocks ----
    x = data_input.astype(jnp.float32).reshape(G, Bt, T_in * OD)

    weights = [w_emb_d, wqkv, wo, w_ff1, b_ff1, w_ff2, w_ckv, w_out, vecs]

    in_specs = [
        pl.BlockSpec((1, Bt, T_in * OD), lambda g: (g, 0, 0)),
        pl.BlockSpec((M, H), lambda g: (0, 0)),
        pl.BlockSpec((Mq, H), lambda g: (0, 0)),
        pl.BlockSpec((M, M), lambda g: (0, 0)),
        pl.BlockSpec((Mq, M), lambda g: (0, 0)),
    ] + [pl.BlockSpec(w.shape, lambda g, _nd=w.ndim: (0,) * _nd) for w in weights]

    # NOTE: at H=64/FFN=128 VMEM is a non-issue; if H/FFN grow, single-buffer the
    # constant-index weight operands (pipeline_mode=pl.Buffered(1)) and set
    # vmem_limit_bytes explicitly (v7x has 64 MiB VMEM).
    out = pl.pallas_call(
        model_wrapper_kernel,
        out_shape=jax.ShapeDtypeStruct((G, Bt, T_out * OD), jnp.float32),
        grid_spec=pltpu.PrefetchScalarGridSpec(
            num_scalar_prefetch=0,
            grid=(G,),
            in_specs=in_specs,
            out_specs=pl.BlockSpec((1, Bt, T_out * OD), lambda g: (g, 0, 0)),
        ),
        compiler_params=pltpu.CompilerParams(dimension_semantics=("parallel",)),
    )(x, temb_tiled, cq_tiled, mask_s, mask_c, *weights)

    return out.reshape(B, T_out, OD)


if __name__ == "__main__":
    # small shapes consistent with the module
    B = 2                # batch of data sequences
    INPUT_LEN = 8        # self.input_len (data_T)
    OUTPUT_DIM = 2       # self.output_dim
    HIDDEN = 64
    FFN = 128
    INPUT_STEP = 1
    OUTPUT_STEP = 1
    EVAL_OUT_START, EVAL_OUT_END = 0, 8   # output_len = ceil((end-start)/step) = 8

    key = jax.random.PRNGKey(0)
    k_data, k_params = jax.random.split(key)

    # env.generator.t_eval
    t_eval = jnp.linspace(0.0, 1.0, 16, dtype=jnp.float32)
    t_input = t_eval[0:INPUT_LEN:INPUT_STEP]                              # (8,)
    query_times = t_eval[EVAL_OUT_START:EVAL_OUT_END:OUTPUT_STEP]         # (8,)

    # bags of data sequences (B, data_T, output_dim)
    data_input = jax.random.normal(k_data, (B, INPUT_LEN, OUTPUT_DIM), jnp.float32)

    params = init_params(k_params, OUTPUT_DIM, HIDDEN, FFN)

    data_outputs = model_wrapper_forward(data_input, t_input, query_times, params)
    data_outputs = jax.block_until_ready(data_outputs)
    text_outputs = []   # no_text=True / data_only=True -> module returns no text generations

    output_len = (EVAL_OUT_END - EVAL_OUT_START) // OUTPUT_STEP
    assert data_outputs.shape == (B, output_len, OUTPUT_DIM), data_outputs.shape
    assert bool(jnp.all(jnp.isfinite(data_outputs)))
    print("KERNEL_OK")
</pallas_src>

<mosaic_0001>
module attributes {stable_mosaic.version = 11 : i64} {
  func.func @model_wrapper_kernel(%arg0: i32, %arg1: memref<1x1x16xf32, #tpu.memory_space<vmem>>, %arg2: memref<8x64xf32, #tpu.memory_space<vmem>>, %arg3: memref<8x64xf32, #tpu.memory_space<vmem>>, %arg4: memref<8x8xf32, #tpu.memory_space<vmem>>, %arg5: memref<8x8xf32, #tpu.memory_space<vmem>>, %arg6: memref<2x64xbf16, #tpu.memory_space<vmem>>, %arg7: memref<64x384xbf16, #tpu.memory_space<vmem>>, %arg8: memref<64x64xbf16, #tpu.memory_space<vmem>>, %arg9: memref<64x128xbf16, #tpu.memory_space<vmem>>, %arg10: memref<1x128xf32, #tpu.memory_space<vmem>>, %arg11: memref<128x64xbf16, #tpu.memory_space<vmem>>, %arg12: memref<64x256xbf16, #tpu.memory_space<vmem>>, %arg13: memref<64x2xbf16, #tpu.memory_space<vmem>>, %arg14: memref<8x64xf32, #tpu.memory_space<vmem>>, %arg15: memref<1x1x16xf32, #tpu.memory_space<vmem>>) attributes {dimension_semantics = [#tpu.dimension_semantics<parallel>], iteration_bounds = array<i64: 2>, scalar_prefetch = 0 : i64, scratch_operands = 0 : i64, tpu.core_type = #tpu.core_type<tc>, window_params = [{transform_indices = @transform_0, window_bounds = array<i64: 1, 1, 16>}, {pipeline_mode = #tpu.pipeline_mode<synchronous>, transform_indices = @transform_1, window_bounds = array<i64: 8, 64>}, {pipeline_mode = #tpu.pipeline_mode<synchronous>, transform_indices = @transform_2, window_bounds = array<i64: 8, 64>}, {pipeline_mode = #tpu.pipeline_mode<synchronous>, transform_indices = @transform_3, window_bounds = array<i64: 8, 8>}, {pipeline_mode = #tpu.pipeline_mode<synchronous>, transform_indices = @transform_4, window_bounds = array<i64: 8, 8>}, {pipeline_mode = #tpu.pipeline_mode<synchronous>, transform_indices = @transform_5, window_bounds = array<i64: 2, 64>}, {pipeline_mode = #tpu.pipeline_mode<synchronous>, transform_indices = @transform_6, window_bounds = array<i64: 64, 384>}, {pipeline_mode = #tpu.pipeline_mode<synchronous>, transform_indices = @transform_7, window_bounds = array<i64: 64, 64>}, {pipeline_mode = #tpu.pipeline_mode<synchronous>, transform_indices = @transform_8, window_bounds = array<i64: 64, 128>}, {pipeline_mode = #tpu.pipeline_mode<synchronous>, transform_indices = @transform_9, window_bounds = array<i64: 1, 128>}, {pipeline_mode = #tpu.pipeline_mode<synchronous>, transform_indices = @transform_10, window_bounds = array<i64: 128, 64>}, {pipeline_mode = #tpu.pipeline_mode<synchronous>, transform_indices = @transform_11, window_bounds = array<i64: 64, 256>}, {pipeline_mode = #tpu.pipeline_mode<synchronous>, transform_indices = @transform_12, window_bounds = array<i64: 64, 2>}, {pipeline_mode = #tpu.pipeline_mode<synchronous>, transform_indices = @transform_13, window_bounds = array<i64: 8, 64>}, {transform_indices = @transform_14, window_bounds = array<i64: 1, 1, 16>}]} {
    %c0 = arith.constant 0 : index
    %c0_0 = arith.constant 0 : index
    %0 = vector.load %arg14[%c0, %c0_0] : memref<8x64xf32, #tpu.memory_space<vmem>>, vector<8x64xf32>
    %1 = vector.extract_strided_slice %0 {offsets = [0, 0], sizes = [1, 64], strides = [1, 1]} : vector<8x64xf32> to vector<1x64xf32>
    %2 = vector.extract_strided_slice %0 {offsets = [1, 0], sizes = [1, 64], strides = [1, 1]} : vector<8x64xf32> to vector<1x64xf32>
    %3 = vector.extract_strided_slice %0 {offsets = [2, 0], sizes = [1, 64], strides = [1, 1]} : vector<8x64xf32> to vector<1x64xf32>
    %4 = vector.extract_strided_slice %0 {offsets = [3, 0], sizes = [1, 64], strides = [1, 1]} : vector<8x64xf32> to vector<1x64xf32>
    %5 = vector.extract_strided_slice %0 {offsets = [4, 0], sizes = [1, 64], strides = [1, 1]} : vector<8x64xf32> to vector<1x64xf32>
    %6 = vector.extract_strided_slice %0 {offsets = [5, 0], sizes = [1, 64], strides = [1, 1]} : vector<8x64xf32> to vector<1x64xf32>
    %7 = vector.extract_strided_slice %0 {offsets = [6, 0], sizes = [1, 2], strides = [1, 1]} : vector<8x64xf32> to vector<1x2xf32>
    %c0_1 = arith.constant 0 : index
    %c0_2 = arith.constant 0 : index
    %c0_3 = arith.constant 0 : index
    %8 = vector.load %arg1[%c0_1, %c0_2, %c0_3] : memref<1x1x16xf32, #tpu.memory_space<vmem>>, vector<1x1x16xf32>
    %9 = vector.shape_cast %8 : vector<1x1x16xf32> to vector<1x16xf32>
    %10 = vector.shape_cast %9 : vector<1x16xf32> to vector<1x8x2xf32>
    %cst = arith.constant dense<0.000000e+00> : vector<1x2xf32>
    %11 = vector.multi_reduction <add>, %10, %cst [1] : vector<1x8x2xf32> to vector<1x2xf32>
    %12 = vector.shape_cast %11 : vector<1x2xf32> to vector<1x1x2xf32>
    %cst_4 = arith.constant 8.000000e+00 : f32
    %13 = vector.broadcast %cst_4 : f32 to vector<1x1x2xf32>
    %14 = arith.divf %12, %13 : vector<1x1x2xf32>
    %15 = vector.broadcast %14 : vector<1x1x2xf32> to vector<1x8x2xf32>
    %16 = arith.subf %10, %15 : vector<1x8x2xf32>
    %17 = arith.mulf %16, %16 : vector<1x8x2xf32>
    %cst_5 = arith.constant dense<0.000000e+00> : vector<1x2xf32>
    %18 = vector.multi_reduction <add>, %17, %cst_5 [1] : vector<1x8x2xf32> to vector<1x2xf32>
    %19 = vector.shape_cast %18 : vector<1x2xf32> to vector<1x1x2xf32>
    %cst_6 = arith.constant 8.000000e+00 : f32
    %20 = vector.broadcast %cst_6 : f32 to vector<1x1x2xf32>
    %21 = arith.divf %19, %20 : vector<1x1x2xf32>
    %22 = vector.broadcast %14 : vector<1x1x2xf32> to vector<1x8x2xf32>
    %23 = arith.subf %10, %22 : vector<1x8x2xf32>
    %cst_7 = arith.constant 9.99999997E-7 : f32
    %24 = vector.broadcast %cst_7 : f32 to vector<1x1x2xf32>
    %25 = arith.addf %21, %24 : vector<1x1x2xf32>
    %26 = math.rsqrt %25 : vector<1x1x2xf32>
    %27 = vector.broadcast %26 : vector<1x1x2xf32> to vector<1x8x2xf32>
    %28 = arith.mulf %23, %27 : vector<1x8x2xf32>
    %29 = vector.shape_cast %28 : vector<1x8x2xf32> to vector<8x2xf32>
    %c0_8 = arith.constant 0 : index
    %c0_9 = arith.constant 0 : index
    %30 = vector.load %arg6[%c0_8, %c0_9] : memref<2x64xbf16, #tpu.memory_space<vmem>>, vector<2x64xbf16>
    %31 = arith.truncf %29 : vector<8x2xf32> to vector<8x2xbf16>
    %cst_10 = arith.constant dense<0.000000e+00> : vector<8x64xf32>
    %32 = tpu.matmul %31, %30, %cst_10 {dimension_numbers = #tpu.dot_dimension_numbers<[1], [0], [0], [1], [0, 0, 1, 1], [], []>} : vector<8x2xbf16>, vector<2x64xbf16>, vector<8x64xf32> -> vector<8x64xf32>
    %c0_11 = arith.constant 0 : index
    %c0_12 = arith.constant 0 : index
    %33 = vector.load %arg2[%c0_11, %c0_12] : memref<8x64xf32, #tpu.memory_space<vmem>>, vector<8x64xf32>
    %34 = arith.addf %32, %33 : vector<8x64xf32>
    %c0_13 = arith.constant 0 : index
    %c0_14 = arith.constant 0 : index
    %35 = vector.load %arg7[%c0_13, %c0_14] : memref<64x384xbf16, #tpu.memory_space<vmem>>, vector<64x384xbf16>
    %36 = arith.truncf %34 : vector<8x64xf32> to vector<8x64xbf16>
    %cst_15 = arith.constant dense<0.000000e+00> : vector<8x384xf32>
    %37 = tpu.matmul %36, %35, %cst_15 {dimension_numbers = #tpu.dot_dimension_numbers<[1], [0], [0], [1], [0, 0, 1, 1], [], []>} : vector<8x64xbf16>, vector<64x384xbf16>, vector<8x384xf32> -> vector<8x384xf32>
    %38 = vector.extract_strided_slice %37 {offsets = [0, 0], sizes = [8, 64], strides = [1, 1]} : vector<8x384xf32> to vector<8x64xf32>
    %39 = vector.extract_strided_slice %37 {offsets = [0, 128], sizes = [8, 64], strides = [1, 1]} : vector<8x384xf32> to vector<8x64xf32>
    %40 = vector.extract_strided_slice %37 {offsets = [0, 256], sizes = [8, 64], strides = [1, 1]} : vector<8x384xf32> to vector<8x64xf32>
    %41 = arith.truncf %38 : vector<8x64xf32> to vector<8x64xbf16>
    %42 = arith.truncf %39 : vector<8x64xf32> to vector<8x64xbf16>
    %cst_16 = arith.constant dense<0.000000e+00> : vector<8x8xf32>
    %43 = tpu.matmul %41, %42, %cst_16 {dimension_numbers = #tpu.dot_dimension_numbers<[1], [1], [0], [0], [0, 0, 1, 0], [], []>} : vector<8x64xbf16>, vector<8x64xbf16>, vector<8x8xf32> -> vector<8x8xf32>
    %c0_17 = arith.constant 0 : index
    %c0_18 = arith.constant 0 : index
    %44 = vector.load %arg4[%c0_17, %c0_18] : memref<8x8xf32, #tpu.memory_space<vmem>>, vector<8x8xf32>
    %45 = arith.addf %43, %44 : vector<8x8xf32>
    %cst_19 = arith.constant dense<0xFF800000> : vector<8xf32>
    %46 = vector.multi_reduction <maximumf>, %45, %cst_19 [1] : vector<8x8xf32> to vector<8xf32>
    %47 = vector.shape_cast %46 : vector<8xf32> to vector<8x1xf32>
    %48 = vector.broadcast %47 : vector<8x1xf32> to vector<8x8xf32>
    %49 = arith.subf %45, %48 : vector<8x8xf32>
    %50 = math.exp %49 : vector<8x8xf32>
    %cst_20 = arith.constant dense<0.000000e+00> : vector<8xf32>
    %51 = vector.multi_reduction <add>, %50, %cst_20 [1] : vector<8x8xf32> to vector<8xf32>
    %52 = vector.shape_cast %51 : vector<8xf32> to vector<8x1xf32>
    %53 = tpu.reciprocal %52 {approx = true} : vector<8x1xf32> -> vector<8x1xf32>
    %54 = vector.broadcast %53 : vector<8x1xf32> to vector<8x8xf32>
    %55 = arith.mulf %50, %54 : vector<8x8xf32>
    %56 = arith.truncf %55 : vector<8x8xf32> to vector<8x8xbf16>
    %57 = arith.truncf %40 : vector<8x64xf32> to vector<8x64xbf16>
    %cst_21 = arith.constant dense<0.000000e+00> : vector<8x64xf32>
    %58 = tpu.matmul %56, %57, %cst_21 {dimension_numbers = #tpu.dot_dimension_numbers<[1], [0], [0], [1], [0, 0, 1, 1], [], []>} : vector<8x8xbf16>, vector<8x64xbf16>, vector<8x64xf32> -> vector<8x64xf32>
    %c0_22 = arith.constant 0 : index
    %c0_23 = arith.constant 0 : index
    %59 = vector.load %arg8[%c0_22, %c0_23] : memref<64x64xbf16, #tpu.memory_space<vmem>>, vector<64x64xbf16>
    %60 = arith.truncf %58 : vector<8x64xf32> to vector<8x64xbf16>
    %cst_24 = arith.constant dense<0.000000e+00> : vector<8x64xf32>
    %61 = tpu.matmul %60, %59, %cst_24 {dimension_numbers = #tpu.dot_dimension_numbers<[1], [0], [0], [1], [0, 0, 1, 1], [], []>} : vector<8x64xbf16>, vector<64x64xbf16>, vector<8x64xf32> -> vector<8x64xf32>
    %62 = vector.broadcast %1 : vector<1x64xf32> to vector<8x64xf32>
    %63 = arith.addf %61, %62 : vector<8x64xf32>
    %64 = arith.addf %34, %63 : vector<8x64xf32>
    %cst_25 = arith.constant dense<0.000000e+00> : vector<8xf32>
    %65 = vector.multi_reduction <add>, %64, %cst_25 [1] : vector<8x64xf32> to vector<8xf32>
    %66 = vector.shape_cast %65 : vector<8xf32> to vector<8x1xf32>
    %cst_26 = arith.constant 6.400000e+01 : f32
    %67 = vector.broadcast %cst_26 : f32 to vector<8x1xf32>
    %68 = arith.divf %66, %67 : vector<8x1xf32>
    %69 = vector.broadcast %68 : vector<8x1xf32> to vector<8x64xf32>
    %70 = arith.subf %64, %69 : vector<8x64xf32>
    %71 = arith.mulf %70, %70 : vector<8x64xf32>
    %cst_27 = arith.constant dense<0.000000e+00> : vector<8xf32>
    %72 = vector.multi_reduction <add>, %71, %cst_27 [1] : vector<8x64xf32> to vector<8xf32>
    %73 = vector.shape_cast %72 : vector<8xf32> to vector<8x1xf32>
    %cst_28 = arith.constant 6.400000e+01 : f32
    %74 = vector.broadcast %cst_28 : f32 to vector<8x1xf32>
    %75 = arith.divf %73, %74 : vector<8x1xf32>
    %76 = vector.broadcast %68 : vector<8x1xf32> to vector<8x64xf32>
    %77 = arith.subf %64, %76 : vector<8x64xf32>
    %cst_29 = arith.constant 9.99999974E-6 : f32
    %78 = vector.broadcast %cst_29 : f32 to vector<8x1xf32>
    %79 = arith.addf %75, %78 : vector<8x1xf32>
    %80 = math.rsqrt %79 : vector<8x1xf32>
    %81 = vector.broadcast %80 : vector<8x1xf32> to vector<8x64xf32>
    %82 = arith.mulf %77, %81 : vector<8x64xf32>
    %83 = vector.broadcast %2 : vector<1x64xf32> to vector<8x64xf32>
    %84 = arith.mulf %82, %83 : vector<8x64xf32>
    %85 = vector.broadcast %3 : vector<1x64xf32> to vector<8x64xf32>
    %86 = arith.addf %84, %85 : vector<8x64xf32>
    %c0_30 = arith.constant 0 : index
    %c0_31 = arith.constant 0 : index
    %87 = vector.load %arg9[%c0_30, %c0_31] : memref<64x128xbf16, #tpu.memory_space<vmem>>, vector<64x128xbf16>
    %88 = arith.truncf %86 : vector<8x64xf32> to vector<8x64xbf16>
    %cst_32 = arith.constant dense<0.000000e+00> : vector<8x128xf32>
    %89 = tpu.matmul %88, %87, %cst_32 {dimension_numbers = #tpu.dot_dimension_numbers<[1], [0], [0], [1], [0, 0, 1, 1], [], []>} : vector<8x64xbf16>, vector<64x128xbf16>, vector<8x128xf32> -> vector<8x128xf32>
    %c0_33 = arith.constant 0 : index
    %c0_34 = arith.constant 0 : index
    %90 = vector.load %arg10[%c0_33, %c0_34] : memref<1x128xf32, #tpu.memory_space<vmem>>, vector<1x128xf32>
    %91 = vector.broadcast %90 : vector<1x128xf32> to vector<8x128xf32>
    %92 = arith.addf %89, %91 : vector<8x128xf32>
    %cst_35 = arith.constant 5.000000e-01 : f32
    %93 = vector.broadcast %cst_35 : f32 to vector<8x128xf32>
    %94 = arith.mulf %93, %92 : vector<8x128xf32>
    %cst_36 = arith.constant 4.471500e-02 : f32
    %95 = vector.broadcast %cst_36 : f32 to vector<8x128xf32>
    %96 = arith.mulf %95, %92 : vector<8x128xf32>
    %97 = arith.mulf %96, %92 : vector<8x128xf32>
    %98 = arith.mulf %97, %92 : vector<8x128xf32>
    %99 = arith.addf %92, %98 : vector<8x128xf32>
    %cst_37 = arith.constant 0.797884583 : f32
    %100 = vector.broadcast %cst_37 : f32 to vector<8x128xf32>
    %101 = arith.mulf %100, %99 : vector<8x128xf32>
    %102 = math.tanh %101 : vector<8x128xf32>
    %cst_38 = arith.constant 1.000000e+00 : f32
    %103 = vector.broadcast %cst_38 : f32 to vector<8x128xf32>
    %104 = arith.addf %103, %102 : vector<8x128xf32>
    %105 = arith.mulf %94, %104 : vector<8x128xf32>
    %c0_39 = arith.constant 0 : index
    %c0_40 = arith.constant 0 : index
    %106 = vector.load %arg11[%c0_39, %c0_40] : memref<128x64xbf16, #tpu.memory_space<vmem>>, vector<128x64xbf16>
    %107 = arith.truncf %105 : vector<8x128xf32> to vector<8x128xbf16>
    %cst_41 = arith.constant dense<0.000000e+00> : vector<8x64xf32>
    %108 = tpu.matmul %107, %106, %cst_41 {dimension_numbers = #tpu.dot_dimension_numbers<[1], [0], [0], [1], [0, 0, 1, 1], [], []>} : vector<8x128xbf16>, vector<128x64xbf16>, vector<8x64xf32> -> vector<8x64xf32>
    %109 = vector.broadcast %4 : vector<1x64xf32> to vector<8x64xf32>
    %110 = arith.addf %108, %109 : vector<8x64xf32>
    %111 = arith.addf %86, %110 : vector<8x64xf32>
    %cst_42 = arith.constant dense<0.000000e+00> : vector<8xf32>
    %112 = vector.multi_reduction <add>, %111, %cst_42 [1] : vector<8x64xf32> to vector<8xf32>
    %113 = vector.shape_cast %112 : vector<8xf32> to vector<8x1xf32>
    %cst_43 = arith.constant 6.400000e+01 : f32
    %114 = vector.broadcast %cst_43 : f32 to vector<8x1xf32>
    %115 = arith.divf %113, %114 : vector<8x1xf32>
    %116 = vector.broadcast %115 : vector<8x1xf32> to vector<8x64xf32>
    %117 = arith.subf %111, %116 : vector<8x64xf32>
    %118 = arith.mulf %117, %117 : vector<8x64xf32>
    %cst_44 = arith.constant dense<0.000000e+00> : vector<8xf32>
    %119 = vector.multi_reduction <add>, %118, %cst_44 [1] : vector<8x64xf32> to vector<8xf32>
    %120 = vector.shape_cast %119 : vector<8xf32> to vector<8x1xf32>
    %cst_45 = arith.constant 6.400000e+01 : f32
    %121 = vector.broadcast %cst_45 : f32 to vector<8x1xf32>
    %122 = arith.divf %120, %121 : vector<8x1xf32>
    %123 = vector.broadcast %115 : vector<8x1xf32> to vector<8x64xf32>
    %124 = arith.subf %111, %123 : vector<8x64xf32>
    %cst_46 = arith.constant 9.99999974E-6 : f32
    %125 = vector.broadcast %cst_46 : f32 to vector<8x1xf32>
    %126 = arith.addf %122, %125 : vector<8x1xf32>
    %127 = math.rsqrt %126 : vector<8x1xf32>
    %128 = vector.broadcast %127 : vector<8x1xf32> to vector<8x64xf32>
    %129 = arith.mulf %124, %128 : vector<8x64xf32>
    %130 = vector.broadcast %5 : vector<1x64xf32> to vector<8x64xf32>
    %131 = arith.mulf %129, %130 : vector<8x64xf32>
    %132 = vector.broadcast %6 : vector<1x64xf32> to vector<8x64xf32>
    %133 = arith.addf %131, %132 : vector<8x64xf32>
    %c0_47 = arith.constant 0 : index
    %c0_48 = arith.constant 0 : index
    %134 = vector.load %arg12[%c0_47, %c0_48] : memref<64x256xbf16, #tpu.memory_space<vmem>>, vector<64x256xbf16>
    %135 = arith.truncf %133 : vector<8x64xf32> to vector<8x64xbf16>
    %cst_49 = arith.constant dense<0.000000e+00> : vector<8x256xf32>
    %136 = tpu.matmul %135, %134, %cst_49 {dimension_numbers = #tpu.dot_dimension_numbers<[1], [0], [0], [1], [0, 0, 1, 1], [], []>} : vector<8x64xbf16>, vector<64x256xbf16>, vector<8x256xf32> -> vector<8x256xf32>
    %137 = vector.extract_strided_slice %136 {offsets = [0, 0], sizes = [8, 64], strides = [1, 1]} : vector<8x256xf32> to vector<8x64xf32>
    %138 = vector.extract_strided_slice %136 {offsets = [0, 128], sizes = [8, 64], strides = [1, 1]} : vector<8x256xf32> to vector<8x64xf32>
    %c0_50 = arith.constant 0 : index
    %c0_51 = arith.constant 0 : index
    %139 = vector.load %arg3[%c0_50, %c0_51] : memref<8x64xf32, #tpu.memory_space<vmem>>, vector<8x64xf32>
    %140 = arith.truncf %139 : vector<8x64xf32> to vector<8x64xbf16>
    %141 = arith.truncf %137 : vector<8x64xf32> to vector<8x64xbf16>
    %cst_52 = arith.constant dense<0.000000e+00> : vector<8x8xf32>
    %142 = tpu.matmul %140, %141, %cst_52 {dimension_numbers = #tpu.dot_dimension_numbers<[1], [1], [0], [0], [0, 0, 1, 0], [], []>} : vector<8x64xbf16>, vector<8x64xbf16>, vector<8x8xf32> -> vector<8x8xf32>
    %c0_53 = arith.constant 0 : index
    %c0_54 = arith.constant 0 : index
    %143 = vector.load %arg5[%c0_53, %c0_54] : memref<8x8xf32, #tpu.memory_space<vmem>>, vector<8x8xf32>
    %144 = arith.addf %142, %143 : vector<8x8xf32>
    %cst_55 = arith.constant dense<0xFF800000> : vector<8xf32>
    %145 = vector.multi_reduction <maximumf>, %144, %cst_55 [1] : vector<8x8xf32> to vector<8xf32>
    %146 = vector.shape_cast %145 : vector<8xf32> to vector<8x1xf32>
    %147 = vector.broadcast %146 : vector<8x1xf32> to vector<8x8xf32>
    %148 = arith.subf %144, %147 : vector<8x8xf32>
    %149 = math.exp %148 : vector<8x8xf32>
    %cst_56 = arith.constant dense<0.000000e+00> : vector<8xf32>
    %150 = vector.multi_reduction <add>, %149, %cst_56 [1] : vector<8x8xf32> to vector<8xf32>
    %151 = vector.shape_cast %150 : vector<8xf32> to vector<8x1xf32>
    %152 = tpu.reciprocal %151 {approx = true} : vector<8x1xf32> -> vector<8x1xf32>
    %153 = vector.broadcast %152 : vector<8x1xf32> to vector<8x8xf32>
    %154 = arith.mulf %149, %153 : vector<8x8xf32>
    %155 = arith.truncf %154 : vector<8x8xf32> to vector<8x8xbf16>
    %156 = arith.truncf %138 : vector<8x64xf32> to vector<8x64xbf16>
    %cst_57 = arith.constant dense<0.000000e+00> : vector<8x64xf32>
    %157 = tpu.matmul %155, %156, %cst_57 {dimension_numbers = #tpu.dot_dimension_numbers<[1], [0], [0], [1], [0, 0, 1, 1], [], []>} : vector<8x8xbf16>, vector<8x64xbf16>, vector<8x64xf32> -> vector<8x64xf32>
    %c0_58 = arith.constant 0 : index
    %c0_59 = arith.constant 0 : index
    %158 = vector.load %arg13[%c0_58, %c0_59] : memref<64x2xbf16, #tpu.memory_space<vmem>>, vector<64x2xbf16>
    %159 = arith.truncf %157 : vector<8x64xf32> to vector<8x64xbf16>
    %cst_60 = arith.constant dense<0.000000e+00> : vector<8x2xf32>
    %160 = tpu.matmul %159, %158, %cst_60 {dimension_numbers = #tpu.dot_dimension_numbers<[1], [0], [0], [1], [0, 0, 1, 1], [], []>} : vector<8x64xbf16>, vector<64x2xbf16>, vector<8x2xf32> -> vector<8x2xf32>
    %161 = vector.broadcast %7 : vector<1x2xf32> to vector<8x2xf32>
    %162 = arith.addf %160, %161 : vector<8x2xf32>
    %cst_61 = arith.constant 9.99999997E-7 : f32
    %163 = vector.broadcast %cst_61 : f32 to vector<1x1x2xf32>
    %164 = arith.addf %21, %163 : vector<1x1x2xf32>
    %165 = math.sqrt %164 : vector<1x1x2xf32>
    %166 = vector.shape_cast %162 : vector<8x2xf32> to vector<1x8x2xf32>
    %167 = vector.broadcast %165 : vector<1x1x2xf32> to vector<1x8x2xf32>
    %168 = arith.mulf %166, %167 : vector<1x8x2xf32>
    %169 = vector.broadcast %14 : vector<1x1x2xf32> to vector<1x8x2xf32>
    %170 = arith.addf %168, %169 : vector<1x8x2xf32>
    %171 = vector.shape_cast %170 : vector<1x8x2xf32> to vector<1x16xf32>
    %c0_62 = arith.constant 0 : index
    %c0_63 = arith.constant 0 : index
    %c0_64 = arith.constant 0 : index
    %172 = vector.load %arg15[%c0_62, %c0_63, %c0_64] : memref<1x1x16xf32, #tpu.memory_space<vmem>>, vector<1x1x16xf32>
    %173 = vector.shape_cast %172 : vector<1x1x16xf32> to vector<1x16xf32>
    %174 = vector.shape_cast %171 : vector<1x16xf32> to vector<1x1x16xf32>
    tpu.vector_store %arg15[%c0_62, %c0_63, %c0_64], %174 {strides = array<i32>} : memref<1x1x16xf32, #tpu.memory_space<vmem>>, vector<1x1x16xf32>,
    return
  }
  func.func @transform_0(%arg0: i32) -> (i32, i32, i32) {
    %c0_i32 = arith.constant 0 : i32
    %c0_i32_0 = arith.constant 0 : i32
    %c0_i32_1 = arith.constant 0 : i32
    return %arg0, %c0_i32, %c0_i32_0 : i32, i32, i32
  }
  func.func @transform_1(%arg0: i32) -> (i32, i32) {
    %c0_i32 = arith.constant 0 : i32
    %c0_i32_0 = arith.constant 0 : i32
    %c0_i32_1 = arith.constant 0 : i32
    return %c0_i32, %c0_i32_0 : i32, i32
  }
  func.func @transform_2(%arg0: i32) -> (i32, i32) {
    %c0_i32 = arith.constant 0 : i32
    %c0_i32_0 = arith.constant 0 : i32
    %c0_i32_1 = arith.constant 0 : i32
    return %c0_i32, %c0_i32_0 : i32, i32
  }
  func.func @transform_3(%arg0: i32) -> (i32, i32) {
    %c0_i32 = arith.constant 0 : i32
    %c0_i32_0 = arith.constant 0 : i32
    %c0_i32_1 = arith.constant 0 : i32
    return %c0_i32, %c0_i32_0 : i32, i32
  }
  func.func @transform_4(%arg0: i32) -> (i32, i32) {
    %c0_i32 = arith.constant 0 : i32
    %c0_i32_0 = arith.constant 0 : i32
    %c0_i32_1 = arith.constant 0 : i32
    return %c0_i32, %c0_i32_0 : i32, i32
  }
  func.func @transform_5(%arg0: i32) -> (i32, i32) {
    %c0_i32 = arith.constant 0 : i32
    %c0_i32_0 = arith.constant 0 : i32
    %c0_i32_1 = arith.constant 0 : i32
    return %c0_i32, %c0_i32_0 : i32, i32
  }
  func.func @transform_6(%arg0: i32) -> (i32, i32) {
    %c0_i32 = arith.constant 0 : i32
    %c0_i32_0 = arith.constant 0 : i32
    %c0_i32_1 = arith.constant 0 : i32
    return %c0_i32, %c0_i32_0 : i32, i32
  }
  func.func @transform_7(%arg0: i32) -> (i32, i32) {
    %c0_i32 = arith.constant 0 : i32
    %c0_i32_0 = arith.constant 0 : i32
    %c0_i32_1 = arith.constant 0 : i32
    return %c0_i32, %c0_i32_0 : i32, i32
  }
  func.func @transform_8(%arg0: i32) -> (i32, i32) {
    %c0_i32 = arith.constant 0 : i32
    %c0_i32_0 = arith.constant 0 : i32
    %c0_i32_1 = arith.constant 0 : i32
    return %c0_i32, %c0_i32_0 : i32, i32
  }
  func.func @transform_9(%arg0: i32) -> (i32, i32) {
    %c0_i32 = arith.constant 0 : i32
    %c0_i32_0 = arith.constant 0 : i32
    %c0_i32_1 = arith.constant 0 : i32
    return %c0_i32, %c0_i32_0 : i32, i32
  }
  func.func @transform_10(%arg0: i32) -> (i32, i32) {
    %c0_i32 = arith.constant 0 : i32
    %c0_i32_0 = arith.constant 0 : i32
    %c0_i32_1 = arith.constant 0 : i32
    return %c0_i32, %c0_i32_0 : i32, i32
  }
  func.func @transform_11(%arg0: i32) -> (i32, i32) {
    %c0_i32 = arith.constant 0 : i32
    %c0_i32_0 = arith.constant 0 : i32
    %c0_i32_1 = arith.constant 0 : i32
    return %c0_i32, %c0_i32_0 : i32, i32
  }
  func.func @transform_12(%arg0: i32) -> (i32, i32) {
    %c0_i32 = arith.constant 0 : i32
    %c0_i32_0 = arith.constant 0 : i32
    %c0_i32_1 = arith.constant 0 : i32
    return %c0_i32, %c0_i32_0 : i32, i32
  }
  func.func @transform_13(%arg0: i32) -> (i32, i32) {
    %c0_i32 = arith.constant 0 : i32
    %c0_i32_0 = arith.constant 0 : i32
    %c0_i32_1 = arith.constant 0 : i32
    return %c0_i32, %c0_i32_0 : i32, i32
  }
  func.func @transform_14(%arg0: i32) -> (i32, i32, i32) {
    %c0_i32 = arith.constant 0 : i32
    %c0_i32_0 = arith.constant 0 : i32
    %c0_i32_1 = arith.constant 0 : i32
    return %arg0, %c0_i32, %c0_i32_0 : i32, i32, i32
  }
}

</mosaic_0001>

<llo_original>
// kernel: model_wrapper_forward.1
$region0: #{model_wrapper_forward.1}
  #allocation0 [shape = 'u32[]', space=smem, size = 0x4, offset = 0x4, fixed_abs, tag = 'smem constant byte address 0x4 - core index']
  #allocation1 [shape = 'u32[144,128]{1,0:T(1,128)}', space=vmem, size = 0x12000, scoped, tag = 'internal scratch']
  %s0 = inlined_call_operand.vmem [shape: f32[2,1,16], index: 0, kind: input, shape index: {}]
  %s1 = inlined_call_operand.vmem [shape: f32[8,64], index: 1, kind: input, shape index: {}]
  %s2 = inlined_call_operand.vmem [shape: f32[8,64], index: 2, kind: input, shape index: {}]
  %s3 = inlined_call_operand.vmem [shape: f32[8,8], index: 3, kind: input, shape index: {}, may-alias: {3,4}]
  %s4 = inlined_call_operand.vmem [shape: f32[8,8], index: 4, kind: input, shape index: {}, may-alias: {3,4}]
  %s5 = inlined_call_operand.vmem [shape: bf16[2,64], index: 5, kind: input, shape index: {}]
  %s6 = inlined_call_operand.vmem [shape: bf16[64,384], index: 6, kind: input, shape index: {}]
  %s7 = inlined_call_operand.vmem [shape: bf16[64,64], index: 7, kind: input, shape index: {}]
  %s8 = inlined_call_operand.vmem [shape: bf16[64,128], index: 8, kind: input, shape index: {}]
  %s9 = inlined_call_operand.vmem [shape: f32[1,128], index: 9, kind: input, shape index: {}]
  %s10 = inlined_call_operand.vmem [shape: bf16[128,64], index: 10, kind: input, shape index: {}]
  %s11 = inlined_call_operand.vmem [shape: bf16[64,256], index: 11, kind: input, shape index: {}]
  %s12 = inlined_call_operand.vmem [shape: bf16[64,2], index: 12, kind: input, shape index: {}]
  %s13 = inlined_call_operand.vmem [shape: f32[8,64], index: 13, kind: input, shape index: {}]
  %s14 = inlined_call_operand.vmem [shape: f32[2,1,16], index: 14, kind: output, shape index: {}]
  %s15 = sld [smem:[#allocation0]]
  $region89: #{model_wrapper_forward.1} parent=0
    _
  %s17 = ssub.s32 1, %s15
  %s18 = scalar_select 0, %s17, %s15
  loop: start=0, step=1, limit=4
  $region2: #{model_wrapper_forward.1} parent=0 // loop_pre_header
    _
  $region3: #{model_wrapper_forward.1} parent=0 // loop_header
    %s20 = sphi 0, %s24
    %p21 = scmp.ge.s32.totalorder %s20, 4
    %s30 = sphi 0, %s32
    %s33 = sphi 0, %s30
    %s34 = sphi 0, %s33
    %s50 = sphi 0, %s34
    %s54 = sphi 0, %s54
    %s56 = sphi 0, %s54
    %s57 = sphi 0, %s56
    %s71 = sphi 0, %s57
    %s75 = sphi 0, %s75
    %s77 = sphi 0, %s75
    %s78 = sphi 0, %s77
    %s92 = sphi 0, %s78
    %s96 = sphi 0, %s96
    %s98 = sphi 0, %s96
    %s99 = sphi 0, %s98
    %s113 = sphi 0, %s99
    %s117 = sphi 0, %s117
    %s119 = sphi 0, %s117
    %s120 = sphi 0, %s119
    %s134 = sphi 0, %s120
    %s138 = sphi 0, %s138
    %s140 = sphi 0, %s138
    %s141 = sphi 0, %s140
    %s155 = sphi 0, %s141
    %s159 = sphi 0, %s159
    %s161 = sphi 0, %s159
    %s162 = sphi 0, %s161
    %s176 = sphi 0, %s162
    %s180 = sphi 0, %s180
    %s182 = sphi 0, %s180
    %s183 = sphi 0, %s182
    %s197 = sphi 0, %s183
    %s201 = sphi 0, %s201
    %s203 = sphi 0, %s201
    %s204 = sphi 0, %s203
    %s218 = sphi 0, %s204
    %s222 = sphi 0, %s222
    %s224 = sphi 0, %s222
    %s225 = sphi 0, %s224
    %s239 = sphi 0, %s225
    %s243 = sphi 0, %s243
    %s245 = sphi 0, %s243
    %s246 = sphi 0, %s245
    %s260 = sphi 0, %s246
    %s264 = sphi 0, %s264
    %s266 = sphi 0, %s264
    %s267 = sphi 0, %s266
    %s281 = sphi 0, %s267
    %s285 = sphi 0, %s285
    %s287 = sphi 0, %s285
    %s288 = sphi 0, %s287
    %s302 = sphi 0, %s288
    %s306 = sphi 0, %s306
    %s308 = sphi 0, %s306
    %s309 = sphi 0, %s308
    %s323 = sphi 0, %s309
    %s329 = sphi 0, %s331
    %s332 = sphi 0, %s329
    %s333 = sphi 0, %s332
    %s349 = sphi 0, %s333
  $region4: #{model_wrapper_forward.1} parent=0 // loop_header_branch
    %23 = sbr.rel (%p21) target = $region8
  $region5: #{model_wrapper_forward.1} parent=0 // loop_body
    %s25 = ssub.s32 %s20, 1
    %s26 = ssub.s32 %s20, 2
    %s27 = sadd.s32 %s20, 1
    %s28 = ssub.s32 %s20, %s27
    %p29 = scmp.eq.s32.totalorder %s28, 0
    %s31 = sadd.s32 %s30, 1
    %s32 = scalar_select %p29, %s30, %s31
    %p35 = pneg %p29
    %p36 = scmp.eq.s32.totalorder %s20, 1
    %p37 = por %p35, %p36
    %p38 = scmp.ne.s32.totalorder %s30, %s33
    %p39 = scmp.eq.s32.totalorder %s20, 0
    %p40 = por %p38, %p39
    %p41 = scmp.ne.s32.totalorder %s30, %s33
    %p42 = scmp.eq.s32.totalorder %s25, 1
    %p43 = por %p41, %p42
    %p44 = scmp.ne.s32.totalorder %s33, %s34
    %p45 = scmp.eq.s32.totalorder %s25, 0
    %p46 = por %p44, %p45
    %p47 = scmp.ne.s32.totalorder %s33, %s34
    %p48 = scmp.eq.s32.totalorder %s26, 1
    %p49 = por %p47, %p48
    %p51 = scmp.ne.s32.totalorder %s34, %s50
    %p52 = scmp.eq.s32.totalorder %s26, 0
    %p53 = por %p51, %p52
    %s55 = sadd.s32 %s54, 1
    %p58 = scmp.eq.s32.totalorder %s20, 1
    %p59 = scmp.ne.s32.totalorder %s54, %s56
    %p60 = scmp.eq.s32.totalorder %s20, 0
    %p61 = por %p59, %p60
    %p62 = scmp.ne.s32.totalorder %s54, %s56
    %p63 = scmp.eq.s32.totalorder %s25, 1
    %p64 = por %p62, %p63
    %p65 = scmp.ne.s32.totalorder %s56, %s57
    %p66 = scmp.eq.s32.totalorder %s25, 0
    %p67 = por %p65, %p66
    %p68 = scmp.ne.s32.totalorder %s56, %s57
    %p69 = scmp.eq.s32.totalorder %s26, 1
    %p70 = por %p68, %p69
    %p72 = scmp.ne.s32.totalorder %s57, %s71
    %p73 = scmp.eq.s32.totalorder %s26, 0
    %p74 = por %p72, %p73
    %s76 = sadd.s32 %s75, 1
    %p79 = scmp.eq.s32.totalorder %s20, 1
    %p80 = scmp.ne.s32.totalorder %s75, %s77
    %p81 = scmp.eq.s32.totalorder %s20, 0
    %p82 = por %p80, %p81
    %p83 = scmp.ne.s32.totalorder %s75, %s77
    %p84 = scmp.eq.s32.totalorder %s25, 1
    %p85 = por %p83, %p84
    %p86 = scmp.ne.s32.totalorder %s77, %s78
    %p87 = scmp.eq.s32.totalorder %s25, 0
    %p88 = por %p86, %p87
    %p89 = scmp.ne.s32.totalorder %s77, %s78
    %p90 = scmp.eq.s32.totalorder %s26, 1
    %p91 = por %p89, %p90
    %p93 = scmp.ne.s32.totalorder %s78, %s92
    %p94 = scmp.eq.s32.totalorder %s26, 0
    %p95 = por %p93, %p94
    %s97 = sadd.s32 %s96, 1
    %p100 = scmp.eq.s32.totalorder %s20, 1
    %p101 = scmp.ne.s32.totalorder %s96, %s98
    %p102 = scmp.eq.s32.totalorder %s20, 0
    %p103 = por %p101, %p102
    %p104 = scmp.ne.s32.totalorder %s96, %s98
    %p105 = scmp.eq.s32.totalorder %s25, 1
    %p106 = por %p104, %p105
    %p107 = scmp.ne.s32.totalorder %s98, %s99
    %p108 = scmp.eq.s32.totalorder %s25, 0
    %p109 = por %p107, %p108
    %p110 = scmp.ne.s32.totalorder %s98, %s99
    %p111 = scmp.eq.s32.totalorder %s26, 1
    %p112 = por %p110, %p111
    %p114 = scmp.ne.s32.totalorder %s99, %s113
    %p115 = scmp.eq.s32.totalorder %s26, 0
    %p116 = por %p114, %p115
    %s118 = sadd.s32 %s117, 1
    %p121 = scmp.eq.s32.totalorder %s20, 1
    %p122 = scmp.ne.s32.totalorder %s117, %s119
    %p123 = scmp.eq.s32.totalorder %s20, 0
    %p124 = por %p122, %p123
    %p125 = scmp.ne.s32.totalorder %s117, %s119
    %p126 = scmp.eq.s32.totalorder %s25, 1
    %p127 = por %p125, %p126
    %p128 = scmp.ne.s32.totalorder %s119, %s120
    %p129 = scmp.eq.s32.totalorder %s25, 0
    %p130 = por %p128, %p129
    %p131 = scmp.ne.s32.totalorder %s119, %s120
    %p132 = scmp.eq.s32.totalorder %s26, 1
    %p133 = por %p131, %p132
    %p135 = scmp.ne.s32.totalorder %s120, %s134
    %p136 = scmp.eq.s32.totalorder %s26, 0
    %p137 = por %p135, %p136
    %s139 = sadd.s32 %s138, 1
    %p142 = scmp.eq.s32.totalorder %s20, 1
    %p143 = scmp.ne.s32.totalorder %s138, %s140
    %p144 = scmp.eq.s32.totalorder %s20, 0
    %p145 = por %p143, %p144
    %p146 = scmp.ne.s32.totalorder %s138, %s140
    %p147 = scmp.eq.s32.totalorder %s25, 1
    %p148 = por %p146, %p147
    %p149 = scmp.ne.s32.totalorder %s140, %s141
    %p150 = scmp.eq.s32.totalorder %s25, 0
    %p151 = por %p149, %p150
    %p152 = scmp.ne.s32.totalorder %s140, %s141
    %p153 = scmp.eq.s32.totalorder %s26, 1
    %p154 = por %p152, %p153
    %p156 = scmp.ne.s32.totalorder %s141, %s155
    %p157 = scmp.eq.s32.totalorder %s26, 0
    %p158 = por %p156, %p157
    %s160 = sadd.s32 %s159, 1
    %p163 = scmp.eq.s32.totalorder %s20, 1
    %p164 = scmp.ne.s32.totalorder %s159, %s161
    %p165 = scmp.eq.s32.totalorder %s20, 0
    %p166 = por %p164, %p165
    %p167 = scmp.ne.s32.totalorder %s159, %s161
    %p168 = scmp.eq.s32.totalorder %s25, 1
    %p169 = por %p167, %p168
    %p170 = scmp.ne.s32.totalorder %s161, %s162
    %p171 = scmp.eq.s32.totalorder %s25, 0
    %p172 = por %p170, %p171
    %p173 = scmp.ne.s32.totalorder %s161, %s162
    %p174 = scmp.eq.s32.totalorder %s26, 1
    %p175 = por %p173, %p174
    %p177 = scmp.ne.s32.totalorder %s162, %s176
    %p178 = scmp.eq.s32.totalorder %s26, 0
    %p179 = por %p177, %p178
    %s181 = sadd.s32 %s180, 1
    %p184 = scmp.eq.s32.totalorder %s20, 1
    %p185 = scmp.ne.s32.totalorder %s180, %s182
    %p186 = scmp.eq.s32.totalorder %s20, 0
    %p187 = por %p185, %p186
    %p188 = scmp.ne.s32.totalorder %s180, %s182
    %p189 = scmp.eq.s32.totalorder %s25, 1
    %p190 = por %p188, %p189
    %p191 = scmp.ne.s32.totalorder %s182, %s183
    %p192 = scmp.eq.s32.totalorder %s25, 0
    %p193 = por %p191, %p192
    %p194 = scmp.ne.s32.totalorder %s182, %s183
    %p195 = scmp.eq.s32.totalorder %s26, 1
    %p196 = por %p194, %p195
    %p198 = scmp.ne.s32.totalorder %s183, %s197
    %p199 = scmp.eq.s32.totalorder %s26, 0
    %p200 = por %p198, %p199
    %s202 = sadd.s32 %s201, 1
    %p205 = scmp.eq.s32.totalorder %s20, 1
    %p206 = scmp.ne.s32.totalorder %s201, %s203
    %p207 = scmp.eq.s32.totalorder %s20, 0
    %p208 = por %p206, %p207
    %p209 = scmp.ne.s32.totalorder %s201, %s203
    %p210 = scmp.eq.s32.totalorder %s25, 1
    %p211 = por %p209, %p210
    %p212 = scmp.ne.s32.totalorder %s203, %s204
    %p213 = scmp.eq.s32.totalorder %s25, 0
    %p214 = por %p212, %p213
    %p215 = scmp.ne.s32.totalorder %s203, %s204
    %p216 = scmp.eq.s32.totalorder %s26, 1
    %p217 = por %p215, %p216
    %p219 = scmp.ne.s32.totalorder %s204, %s218
    %p220 = scmp.eq.s32.totalorder %s26, 0
    %p221 = por %p219, %p220
    %s223 = sadd.s32 %s222, 1
    %p226 = scmp.eq.s32.totalorder %s20, 1
    %p227 = scmp.ne.s32.totalorder %s222, %s224
    %p228 = scmp.eq.s32.totalorder %s20, 0
    %p229 = por %p227, %p228
    %p230 = scmp.ne.s32.totalorder %s222, %s224
    %p231 = scmp.eq.s32.totalorder %s25, 1
    %p232 = por %p230, %p231
    %p233 = scmp.ne.s32.totalorder %s224, %s225
    %p234 = scmp.eq.s32.totalorder %s25, 0
    %p235 = por %p233, %p234
    %p236 = scmp.ne.s32.totalorder %s224, %s225
    %p237 = scmp.eq.s32.totalorder %s26, 1
    %p238 = por %p236, %p237
    %p240 = scmp.ne.s32.totalorder %s225, %s239
    %p241 = scmp.eq.s32.totalorder %s26, 0
    %p242 = por %p240, %p241
    %s244 = sadd.s32 %s243, 1
    %p247 = scmp.eq.s32.totalorder %s20, 1
    %p248 = scmp.ne.s32.totalorder %s243, %s245
    %p249 = scmp.eq.s32.totalorder %s20, 0
    %p250 = por %p248, %p249
    %p251 = scmp.ne.s32.totalorder %s243, %s245
    %p252 = scmp.eq.s32.totalorder %s25, 1
    %p253 = por %p251, %p252
    %p254 = scmp.ne.s32.totalorder %s245, %s246
    %p255 = scmp.eq.s32.totalorder %s25, 0
    %p256 = por %p254, %p255
    %p257 = scmp.ne.s32.totalorder %s245, %s246
    %p258 = scmp.eq.s32.totalorder %s26, 1
    %p259 = por %p257, %p258
    %p261 = scmp.ne.s32.totalorder %s246, %s260
    %p262 = scmp.eq.s32.totalorder %s26, 0
    %p263 = por %p261, %p262
    %s265 = sadd.s32 %s264, 1
    %p268 = scmp.eq.s32.totalorder %s20, 1
    %p269 = scmp.ne.s32.totalorder %s264, %s266
    %p270 = scmp.eq.s32.totalorder %s20, 0
    %p271 = por %p269, %p270
    %p272 = scmp.ne.s32.totalorder %s264, %s266
    %p273 = scmp.eq.s32.totalorder %s25, 1
    %p274 = por %p272, %p273
    %p275 = scmp.ne.s32.totalorder %s266, %s267
    %p276 = scmp.eq.s32.totalorder %s25, 0
    %p277 = por %p275, %p276
    %p278 = scmp.ne.s32.totalorder %s266, %s267
    %p279 = scmp.eq.s32.totalorder %s26, 1
    %p280 = por %p278, %p279
    %p282 = scmp.ne.s32.totalorder %s267, %s281
    %p283 = scmp.eq.s32.totalorder %s26, 0
    %p284 = por %p282, %p283
    %s286 = sadd.s32 %s285, 1
    %p289 = scmp.eq.s32.totalorder %s20, 1
    %p290 = scmp.ne.s32.totalorder %s285, %s287
    %p291 = scmp.eq.s32.totalorder %s20, 0
    %p292 = por %p290, %p291
    %p293 = scmp.ne.s32.totalorder %s285, %s287
    %p294 = scmp.eq.s32.totalorder %s25, 1
    %p295 = por %p293, %p294
    %p296 = scmp.ne.s32.totalorder %s287, %s288
    %p297 = scmp.eq.s32.totalorder %s25, 0
    %p298 = por %p296, %p297
    %p299 = scmp.ne.s32.totalorder %s287, %s288
    %p300 = scmp.eq.s32.totalorder %s26, 1
    %p301 = por %p299, %p300
    %p303 = scmp.ne.s32.totalorder %s288, %s302
    %p304 = scmp.eq.s32.totalorder %s26, 0
    %p305 = por %p303, %p304
    %s307 = sadd.s32 %s306, 1
    %p310 = scmp.eq.s32.totalorder %s20, 1
    %p311 = scmp.ne.s32.totalorder %s306, %s308
    %p312 = scmp.eq.s32.totalorder %s20, 0
    %p313 = por %p311, %p312
    %p314 = scmp.ne.s32.totalorder %s306, %s308
    %p315 = scmp.eq.s32.totalorder %s25, 1
    %p316 = por %p314, %p315
    %p317 = scmp.ne.s32.totalorder %s308, %s309
    %p318 = scmp.eq.s32.totalorder %s25, 0
    %p319 = por %p317, %p318
    %p320 = scmp.ne.s32.totalorder %s308, %s309
    %p321 = scmp.eq.s32.totalorder %s26, 1
    %p322 = por %p320, %p321
    %p324 = scmp.ne.s32.totalorder %s309, %s323
    %p325 = scmp.eq.s32.totalorder %s26, 0
    %p326 = por %p324, %p325
    %s327 = ssub.s32 %s20, %s27
    %p328 = scmp.eq.s32.totalorder %s327, 0
    %s330 = sadd.s32 %s329, 1
    %s331 = scalar_select %p328, %s329, %s330
    %p334 = pneg %p328
    %p335 = scmp.eq.s32.totalorder %s20, 1
    %p336 = por %p334, %p335
    %p337 = scmp.ne.s32.totalorder %s329, %s332
    %p338 = scmp.eq.s32.totalorder %s20, 0
    %p339 = por %p337, %p338
    %p340 = scmp.ne.s32.totalorder %s329, %s332
    %p341 = scmp.eq.s32.totalorder %s25, 1
    %p342 = por %p340, %p341
    %p343 = scmp.ne.s32.totalorder %s332, %s333
    %p344 = scmp.eq.s32.totalorder %s25, 0
    %p345 = por %p343, %p344
    %p346 = scmp.ne.s32.totalorder %s332, %s333
    %p347 = scmp.eq.s32.totalorder %s26, 1
    %p348 = por %p346, %p347
    %p350 = scmp.ne.s32.totalorder %s333, %s349
    %p351 = scmp.eq.s32.totalorder %s26, 0
    %p352 = por %p350, %p351
    %p353 = scmp.le.s32.totalorder 1, %s20
    %p354 = scmp.lt.s32.totalorder %s20, 3
    %p355 = pnand %p353, %p354
    %p356 = pneg %p355
    // Predicated region
    $region9: #{model_wrapper_forward.1} parent=5 // pred_check
      _
    $region10: #{model_wrapper_forward.1} parent=5 // pred_check_branch
      %358 = sbr.rel (%p355) target = $region12
    $region11: #{model_wrapper_forward.1} parent=5 // pred_region
      %s359 = ssub.s32 %s20, 1
      // Predicated region
      $region13: #{model_wrapper_forward.1} parent=11 // pred_check
        %p360 = pneg %p67
      $region14: #{model_wrapper_forward.1} parent=11 // pred_check_branch
        %362 = sbr.rel (%p360) target = $region16
      $region15: #{model_wrapper_forward.1} parent=11 // pred_region
        _
      $region16: #{model_wrapper_forward.1} parent=11 // pred_fallthru
        _
      // Predicated region
      $region17: #{model_wrapper_forward.1} parent=11 // pred_check
        %p363 = pneg %p88
      $region18: #{model_wrapper_forward.1} parent=11 // pred_check_branch
        %365 = sbr.rel (%p363) target = $region20
      $region19: #{model_wrapper_forward.1} parent=11 // pred_region
        _
      $region20: #{model_wrapper_forward.1} parent=11 // pred_fallthru
        _
      // Predicated region
      $region21: #{model_wrapper_forward.1} parent=11 // pred_check
        %p366 = pneg %p109
      $region22: #{model_wrapper_forward.1} parent=11 // pred_check_branch
        %368 = sbr.rel (%p366) target = $region24
      $region23: #{model_wrapper_forward.1} parent=11 // pred_region
        _
      $region24: #{model_wrapper_forward.1} parent=11 // pred_fallthru
        _
      // Predicated region
      $region25: #{model_wrapper_forward.1} parent=11 // pred_check
        %p369 = pneg %p130
      $region26: #{model_wrapper_forward.1} parent=11 // pred_check_branch
        %371 = sbr.rel (%p369) target = $region28
      $region27: #{model_wrapper_forward.1} parent=11 // pred_region
        _
      $region28: #{model_wrapper_forward.1} parent=11 // pred_fallthru
        _
      // Predicated region
      $region29: #{model_wrapper_forward.1} parent=11 // pred_check
        %p372 = pneg %p151
      $region30: #{model_wrapper_forward.1} parent=11 // pred_check_branch
        %374 = sbr.rel (%p372) target = $region32
      $region31: #{model_wrapper_forward.1} parent=11 // pred_region
        _
      $region32: #{model_wrapper_forward.1} parent=11 // pred_fallthru
        _
      // Predicated region
      $region33: #{model_wrapper_forward.1} parent=11 // pred_check
        %p375 = pneg %p172
      $region34: #{model_wrapper_forward.1} parent=11 // pred_check_branch
        %377 = sbr.rel (%p375) target = $region36
      $region35: #{model_wrapper_forward.1} parent=11 // pred_region
        _
      $region36: #{model_wrapper_forward.1} parent=11 // pred_fallthru
        _
      // Predicated region
      $region37: #{model_wrapper_forward.1} parent=11 // pred_check
        %p378 = pneg %p193
      $region38: #{model_wrapper_forward.1} parent=11 // pred_check_branch
        %380 = sbr.rel (%p378) target = $region40
      $region39: #{model_wrapper_forward.1} parent=11 // pred_region
        _
      $region40: #{model_wrapper_forward.1} parent=11 // pred_fallthru
        _
      // Predicated region
      $region41: #{model_wrapper_forward.1} parent=11 // pred_check
        %p381 = pneg %p214
      $region42: #{model_wrapper_forward.1} parent=11 // pred_check_branch
        %383 = sbr.rel (%p381) target = $region44
      $region43: #{model_wrapper_forward.1} parent=11 // pred_region
        _
      $region44: #{model_wrapper_forward.1} parent=11 // pred_fallthru
        _
      // Predicated region
      $region45: #{model_wrapper_forward.1} parent=11 // pred_check
        %p384 = pneg %p235
      $region46: #{model_wrapper_forward.1} parent=11 // pred_check_branch
        %386 = sbr.rel (%p384) target = $region48
      $region47: #{model_wrapper_forward.1} parent=11 // pred_region
        _
      $region48: #{model_wrapper_forward.1} parent=11 // pred_fallthru
        _
      // Predicated region
      $region49: #{model_wrapper_forward.1} parent=11 // pred_check
        %p387 = pneg %p256
      $region50: #{model_wrapper_forward.1} parent=11 // pred_check_branch
        %389 = sbr.rel (%p387) target = $region52
      $region51: #{model_wrapper_forward.1} parent=11 // pred_region
        _
      $region52: #{model_wrapper_forward.1} parent=11 // pred_fallthru
        _
      // Predicated region
      $region53: #{model_wrapper_forward.1} parent=11 // pred_check
        %p390 = pneg %p277
      $region54: #{model_wrapper_forward.1} parent=11 // pred_check_branch
        %392 = sbr.rel (%p390) target = $region56
      $region55: #{model_wrapper_forward.1} parent=11 // pred_region
        _
      $region56: #{model_wrapper_forward.1} parent=11 // pred_fallthru
        _
      // Predicated region
      $region57: #{model_wrapper_forward.1} parent=11 // pred_check
        %p393 = pneg %p298
      $region58: #{model_wrapper_forward.1} parent=11 // pred_check_branch
        %395 = sbr.rel (%p393) target = $region60
      $region59: #{model_wrapper_forward.1} parent=11 // pred_region
        _
      $region60: #{model_wrapper_forward.1} parent=11 // pred_fallthru
        _
      // Predicated region
      $region61: #{model_wrapper_forward.1} parent=11 // pred_check
        %p396 = pneg %p319
      $region62: #{model_wrapper_forward.1} parent=11 // pred_check_branch
        %398 = sbr.rel (%p396) target = $region64
      $region63: #{model_wrapper_forward.1} parent=11 // pred_region
        _
      $region64: #{model_wrapper_forward.1} parent=11 // pred_fallthru
        _
    $region12: #{model_wrapper_forward.1} parent=5 // pred_fallthru
      _
    %p399 = scmp.lt.s32.totalorder %s20, 2
    // Predicated region
    $region65: #{model_wrapper_forward.1} parent=5 // pred_check
      %p400 = pneg %p399
    $region66: #{model_wrapper_forward.1} parent=5 // pred_check_branch
      %402 = sbr.rel (%p400) target = $region68
    $region67: #{model_wrapper_forward.1} parent=5 // pred_region
      // Predicated region
      $region69: #{model_wrapper_forward.1} parent=67 // pred_check
        %p403 = pneg %p40
      $region70: #{model_wrapper_forward.1} parent=67 // pred_check_branch
        %405 = sbr.rel (%p403) target = $region72
      $region71: #{model_wrapper_forward.1} parent=67 // pred_region
        %p406 = scmp.lt.s32.totalorder %s20, 1
        %s407 = scalar_select %p406, %s20, 1
        %s408 = scalar_lea.vmem %s0, %s407
      $region72: #{model_wrapper_forward.1} parent=67 // pred_fallthru
        _
    $region68: #{model_wrapper_forward.1} parent=5 // pred_fallthru
      _
    %p409 = scmp.le.s32.totalorder 1, %s20
    %p410 = scmp.lt.s32.totalorder %s20, 3
    %p411 = pnand %p409, %p410
    %p412 = pneg %p411
    // Predicated region
    $region73: #{model_wrapper_forward.1} parent=5 // pred_check
      _
    $region74: #{model_wrapper_forward.1} parent=5 // pred_check_branch
      %414 = sbr.rel (%p411) target = $region76
    $region75: #{model_wrapper_forward.1} parent=5 // pred_region
      %s415 = ssub.s32 %s20, 1
      %p416 = scmp.lt.s32.totalorder %s25, 1
      %s417 = scalar_select %p416, %s25, 1
      %s418 = scalar_lea.vmem %s0, %s417
      %p419 = pneg %p46
      %p420 = pneg %p43
      %p421 = pneg %p67
      %p422 = pneg %p64
      %p423 = pneg %p88
      %p424 = pneg %p85
      %p425 = pneg %p109
      %p426 = pneg %p106
      %p427 = pneg %p130
      %p428 = pneg %p127
      %p429 = pneg %p151
      %p430 = pneg %p148
      %p431 = pneg %p172
      %p432 = pneg %p169
      %p433 = pneg %p193
      %p434 = pneg %p190
      %p435 = pneg %p214
      %p436 = pneg %p211
      %p437 = pneg %p235
      %p438 = pneg %p232
      %p439 = pneg %p256
      %p440 = pneg %p253
      %p441 = pneg %p277
      %p442 = pneg %p274
      %p443 = pneg %p298
      %p444 = pneg %p295
      %p445 = pneg %p319
      %p446 = pneg %p316
      %p447 = pneg %p345
      %p448 = pneg %p342
      %p449 = scmp.lt.s32.totalorder %s25, 1
      %s450 = scalar_select %p449, %s25, 1
      %s451 = scalar_lea.vmem %s14, %s450
      %p452 = scmp.lt.s32.totalorder %s25, 1
      %s453 = scalar_select %p452, %s25, 1
      %s454 = scalar_lea.vmem %s0, %s453
      %p455 = scmp.lt.s32.totalorder %s25, 1
      %s456 = scalar_select %p455, %s25, 1
      %s457 = scalar_lea.vmem %s14, %s456
      %v459 = vld [vmem:[%s13] sm:$0xff]
      %v460 = vld [vmem:[%s454] sm:$0x1]
      %462 = vrot.lane.b32.xlu0 %v460, 126
      %v463 = vpop.permute.xlu0 %462
      %465 = vrot.lane.b32.xlu0 %v460, 124
      %v466 = vpop.permute.xlu0 %465
      %468 = vrot.lane.b32.xlu0 %v460, 122
      %v469 = vpop.permute.xlu0 %468
      %471 = vrot.lane.b32.xlu0 %v460, 120
      %v472 = vpop.permute.xlu0 %471
      %474 = vrot.lane.b32.xlu0 %v460, 118
      %v475 = vpop.permute.xlu0 %474
      %477 = vrot.lane.b32.xlu0 %v460, 116
      %v478 = vpop.permute.xlu0 %477
      %480 = vrot.lane.b32.xlu0 %v460, 114
      %v481 = vpop.permute.xlu0 %480
      %v483 = vcombine.low %v460, %v463
      %v484 = vcombine.low %v466, %v469
      %v485 = vcombine.low %v472, %v475
      %v486 = vcombine.low %v478, %v481
      %v488 = vunpack.c.l.s4 1966171168
      %v489 = vunpack.c.0.s8 %v488
      %v490 = vlaneseq
      %v491 = vshrl.u32 %v490, 7
      %v492 = vsub.s32 %v489, %v491
      %v493 = vrot.slane %v483, %v492
      %v495 = vunpack.c.l.s4 1966171168
      %v496 = vunpack.c.0.s8 %v495
      %v497 = vlaneseq
      %v498 = vshrl.u32 %v497, 7
      %v499 = vsub.s32 %v496, %v498
      %v500 = vrot.slane %v484, %v499
      %v502 = vunpack.c.l.s4 1966171168
      %v503 = vunpack.c.0.s8 %v502
      %v504 = vlaneseq
      %v505 = vshrl.u32 %v504, 7
      %v506 = vsub.s32 %v503, %v505
      %v507 = vrot.slane %v485, %v506
      %v509 = vunpack.c.l.s4 1966171168
      %v510 = vunpack.c.0.s8 %v509
      %v511 = vlaneseq
      %v512 = vshrl.u32 %v511, 7
      %v513 = vsub.s32 %v510, %v512
      %v514 = vrot.slane %v486, %v513
      %v515 = vcombine.low %v493, %v500
      %v516 = vcombine.low %v507, %v514
      %v518 = vunpack.c.l.s4 1966171168
      %v519 = vunpack.c.0.s8 %v518
      %v520 = vlaneseq
      %v521 = vshrl.u32 %v520, 7
      %v522 = vsub.s32 %v519, %v521
      %v523 = vrot.slane %v515, %v522
      %v525 = vunpack.c.l.s4 1966171168
      %v526 = vunpack.c.0.s8 %v525
      %v527 = vlaneseq
      %v528 = vshrl.u32 %v527, 7
      %v529 = vsub.s32 %v526, %v528
      %v530 = vrot.slane %v516, %v529
      %v531 = vcombine.low %v523, %v530
      %vm533 = vcmask 15360
      %v534 = vsel %vm533, %v531, 0.0
      %v535 = vrot.slane %v534, 4
      %v536 = vadd.f32 %v534, %v535
      %v537 = vrot.slane %v536, 2
      %v538 = vadd.f32 %v536, %v537
      %v539 = vrot.slane %v538, 1
      %v540 = vadd.f32 %v538, %v539
      %v541 = vrcp.pop 8.0
      %v542 = vmul.f32 %v540, %v541
      %v544 = vcombine.high %v542, %v542
      %v546 = vunpack.c.l.s4 1966171168
      %v547 = vunpack.c.0.s8 %v546
      %v548 = vlaneseq
      %v549 = vshrl.u32 %v548, 7
      %v550 = vsub.s32 %v547, %v549
      %v551 = vrot.slane %v542, %v550
      %v553 = vunpack.c.l.s4 1966171168
      %v554 = vunpack.c.0.s8 %v553
      %v555 = vlaneseq
      %v556 = vshrl.u32 %v555, 7
      %v557 = vsub.s32 %v554, %v556
      %v558 = vrot.slane %v544, %v557
      %v559 = vcombine.high %v551, %v551
      %v560 = vcombine.high %v558, %v558
      %v562 = vunpack.c.l.s4 1966171168
      %v563 = vunpack.c.0.s8 %v562
      %v564 = vlaneseq
      %v565 = vshrl.u32 %v564, 7
      %v566 = vsub.s32 %v563, %v565
      %v567 = vrot.slane %v551, %v566
      %v569 = vunpack.c.l.s4 1966171168
      %v570 = vunpack.c.0.s8 %v569
      %v571 = vlaneseq
      %v572 = vshrl.u32 %v571, 7
      %v573 = vsub.s32 %v570, %v572
      %v574 = vrot.slane %v558, %v573
      %v576 = vunpack.c.l.s4 1966171168
      %v577 = vunpack.c.0.s8 %v576
      %v578 = vlaneseq
      %v579 = vshrl.u32 %v578, 7
      %v580 = vsub.s32 %v577, %v579
      %v581 = vrot.slane %v559, %v580
      %v583 = vunpack.c.l.s4 1966171168
      %v584 = vunpack.c.0.s8 %v583
      %v585 = vlaneseq
      %v586 = vshrl.u32 %v585, 7
      %v587 = vsub.s32 %v584, %v586
      %v588 = vrot.slane %v560, %v587
      %v589 = vcombine.high %v567, %v567
      %v590 = vcombine.high %v574, %v574
      %v591 = vcombine.high %v581, %v581
      %v592 = vcombine.high %v588, %v588
      %v601 = vsub.f32 %v460, %v567
      %v602 = vsub.f32 %v463, %v581
      %v603 = vsub.f32 %v466, %v589
      %v604 = vsub.f32 %v469, %v591
      %v605 = vsub.f32 %v472, %v574
      %v606 = vsub.f32 %v475, %v588
      %v607 = vsub.f32 %v478, %v590
      %v608 = vsub.f32 %v481, %v592
      %v609 = vmul.f32 %v601, %v601
      %v610 = vmul.f32 %v602, %v602
      %v611 = vmul.f32 %v603, %v603
      %v612 = vmul.f32 %v604, %v604
      %v613 = vmul.f32 %v605, %v605
      %v614 = vmul.f32 %v606, %v606
      %v615 = vmul.f32 %v607, %v607
      %v616 = vmul.f32 %v608, %v608
      %v625 = vcombine.low %v609, %v610
      %v626 = vcombine.low %v611, %v612
      %v627 = vcombine.low %v613, %v614
      %v628 = vcombine.low %v615, %v616
      %v630 = vunpack.c.l.s4 1966171168
      %v631 = vunpack.c.0.s8 %v630
      %v632 = vlaneseq
      %v633 = vshrl.u32 %v632, 7
      %v634 = vsub.s32 %v631, %v633
      %v635 = vrot.slane %v625, %v634
      %v637 = vunpack.c.l.s4 1966171168
      %v638 = vunpack.c.0.s8 %v637
      %v639 = vlaneseq
      %v640 = vshrl.u32 %v639, 7
      %v641 = vsub.s32 %v638, %v640
      %v642 = vrot.slane %v626, %v641
      %v644 = vunpack.c.l.s4 1966171168
      %v645 = vunpack.c.0.s8 %v644
      %v646 = vlaneseq
      %v647 = vshrl.u32 %v646, 7
      %v648 = vsub.s32 %v645, %v647
      %v649 = vrot.slane %v627, %v648
      %v651 = vunpack.c.l.s4 1966171168
      %v652 = vunpack.c.0.s8 %v651
      %v653 = vlaneseq
      %v654 = vshrl.u32 %v653, 7
      %v655 = vsub.s32 %v652, %v654
      %v656 = vrot.slane %v628, %v655
      %v657 = vcombine.low %v635, %v642
      %v658 = vcombine.low %v649, %v656
      %v660 = vunpack.c.l.s4 1966171168
      %v661 = vunpack.c.0.s8 %v660
      %v662 = vlaneseq
      %v663 = vshrl.u32 %v662, 7
      %v664 = vsub.s32 %v661, %v663
      %v665 = vrot.slane %v657, %v664
      %v667 = vunpack.c.l.s4 1966171168
      %v668 = vunpack.c.0.s8 %v667
      %v669 = vlaneseq
      %v670 = vshrl.u32 %v669, 7
      %v671 = vsub.s32 %v668, %v670
      %v672 = vrot.slane %v658, %v671
      %v673 = vcombine.low %v665, %v672
      %v675 = vsel %vm533, %v673, 0.0
      %v676 = vrot.slane %v675, 4
      %v677 = vadd.f32 %v675, %v676
      %v678 = vrot.slane %v677, 2
      %v679 = vadd.f32 %v677, %v678
      %v680 = vrot.slane %v679, 1
      %v681 = vadd.f32 %v679, %v680
      %v682 = vmul.f32 %v681, %v541
      %v683 = vadd.f32 %v682, 1e-06
      %v684 = vrsqrt.pop %v683
      %v686 = vcombine.high %v684, %v684
      %v688 = vunpack.c.l.s4 1966171168
      %v689 = vunpack.c.0.s8 %v688
      %v690 = vlaneseq
      %v691 = vshrl.u32 %v690, 7
      %v692 = vsub.s32 %v689, %v691
      %v693 = vrot.slane %v684, %v692
      %v695 = vunpack.c.l.s4 1966171168
      %v696 = vunpack.c.0.s8 %v695
      %v697 = vlaneseq
      %v698 = vshrl.u32 %v697, 7
      %v699 = vsub.s32 %v696, %v698
      %v700 = vrot.slane %v686, %v699
      %v701 = vcombine.high %v693, %v693
      %v702 = vcombine.high %v700, %v700
      %v704 = vunpack.c.l.s4 1966171168
      %v705 = vunpack.c.0.s8 %v704
      %v706 = vlaneseq
      %v707 = vshrl.u32 %v706, 7
      %v708 = vsub.s32 %v705, %v707
      %v709 = vrot.slane %v693, %v708
      %v711 = vunpack.c.l.s4 1966171168
      %v712 = vunpack.c.0.s8 %v711
      %v713 = vlaneseq
      %v714 = vshrl.u32 %v713, 7
      %v715 = vsub.s32 %v712, %v714
      %v716 = vrot.slane %v700, %v715
      %v718 = vunpack.c.l.s4 1966171168
      %v719 = vunpack.c.0.s8 %v718
      %v720 = vlaneseq
      %v721 = vshrl.u32 %v720, 7
      %v722 = vsub.s32 %v719, %v721
      %v723 = vrot.slane %v701, %v722
      %v725 = vunpack.c.l.s4 1966171168
      %v726 = vunpack.c.0.s8 %v725
      %v727 = vlaneseq
      %v728 = vshrl.u32 %v727, 7
      %v729 = vsub.s32 %v726, %v728
      %v730 = vrot.slane %v702, %v729
      %v731 = vcombine.high %v709, %v709
      %v732 = vcombine.high %v716, %v716
      %v733 = vcombine.high %v723, %v723
      %v734 = vcombine.high %v730, %v730
      %v743 = vmul.f32 %v601, %v709
      %v744 = vmul.f32 %v602, %v723
      %v745 = vmul.f32 %v603, %v731
      %v746 = vmul.f32 %v604, %v733
      %v747 = vmul.f32 %v605, %v716
      %v748 = vmul.f32 %v606, %v730
      %v749 = vmul.f32 %v607, %v732
      %v750 = vmul.f32 %v608, %v734
      %v751 = vld [vmem:[%s5] sm:$0x1]
      %v760 = vcombine.low %v743, %v744
      %v761 = vcombine.low %v745, %v746
      %v762 = vcombine.low %v747, %v748
      %v763 = vcombine.low %v749, %v750
      %v765 = vunpack.c.l.s4 1966171168
      %v766 = vunpack.c.0.s8 %v765
      %v767 = vlaneseq
      %v768 = vshrl.u32 %v767, 7
      %v769 = vsub.s32 %v766, %v768
      %v770 = vrot.slane %v760, %v769
      %v772 = vunpack.c.l.s4 1966171168
      %v773 = vunpack.c.0.s8 %v772
      %v774 = vlaneseq
      %v775 = vshrl.u32 %v774, 7
      %v776 = vsub.s32 %v773, %v775
      %v777 = vrot.slane %v761, %v776
      %v779 = vunpack.c.l.s4 1966171168
      %v780 = vunpack.c.0.s8 %v779
      %v781 = vlaneseq
      %v782 = vshrl.u32 %v781, 7
      %v783 = vsub.s32 %v780, %v782
      %v784 = vrot.slane %v762, %v783
      %v786 = vunpack.c.l.s4 1966171168
      %v787 = vunpack.c.0.s8 %v786
      %v788 = vlaneseq
      %v789 = vshrl.u32 %v788, 7
      %v790 = vsub.s32 %v787, %v789
      %v791 = vrot.slane %v763, %v790
      %v792 = vcombine.low %v770, %v777
      %v793 = vcombine.low %v784, %v791
      %v795 = vunpack.c.l.s4 1966171168
      %v796 = vunpack.c.0.s8 %v795
      %v797 = vlaneseq
      %v798 = vshrl.u32 %v797, 7
      %v799 = vsub.s32 %v796, %v798
      %v800 = vrot.slane %v792, %v799
      %v802 = vunpack.c.l.s4 1966171168
      %v803 = vunpack.c.0.s8 %v802
      %v804 = vlaneseq
      %v805 = vshrl.u32 %v804, 7
      %v806 = vsub.s32 %v803, %v805
      %v807 = vrot.slane %v793, %v806
      %v808 = vcombine.low %v800, %v807
      %v810 = vpack.c.bf16 %v808, %v808
      %v811 = vld [vmem:[%s1] sm:$0xff]
      %v813 = vsel %vm533, %v810, 0
      %vm815 = vcmask 1040384
      %v817 = vsel %vm815, %v751, 0
      %819 = vmatprep.subr.bf16.mxu0 0
      %820 = vmatpush1.bf16.msra.mxu0 %v817
      %821 = vmatprep.subr.bf16.mxu0 0
      %822 = vmatpush1.bf16.msra.mxu0 0
      %823 = vmatprep.subr.bf16.mxu0 0
      %824 = vmatpush1.bf16.msra.mxu0 0
      %825 = vmatprep.subr.bf16.mxu0 0
      %826 = vmatpush1.bf16.msra.mxu0 0
      %827 = vmatprep.subr.bf16.mxu0 0
      %828 = vmatpush1.bf16.msra.mxu0 0
      %829 = vmatprep.subr.bf16.mxu0 0
      %830 = vmatpush1.bf16.msra.mxu0 0
      %831 = vmatprep.subr.bf16.mxu0 0
      %832 = vmatpush1.bf16.msra.mxu0 0
      %833 = vmatprep.subr.bf16.mxu0 0
      %834 = vmatpush1.bf16.msra.mxu0 0
      %835 = vmatprep.subr.bf16.mxu0 0
      %836 = vmatpush1.bf16.msra.mxu0 0
      %837 = vmatprep.subr.bf16.mxu0 0
      %838 = vmatpush1.bf16.msra.mxu0 0
      %839 = vmatprep.subr.bf16.mxu0 0
      %840 = vmatpush1.bf16.msra.mxu0 0
      %841 = vmatprep.subr.bf16.mxu0 0
      %842 = vmatpush1.bf16.msra.mxu0 0
      %843 = vmatprep.subr.bf16.mxu0 0
      %844 = vmatpush1.bf16.msra.mxu0 0
      %845 = vmatprep.subr.bf16.mxu0 0
      %846 = vmatpush1.bf16.msra.mxu0 0
      %847 = vmatprep.subr.bf16.mxu0 0
      %848 = vmatpush1.bf16.msra.mxu0 0
      %849 = vmatprep.subr.bf16.mxu0 0
      %850 = vmatpush1.bf16.msra.mxu0 0
      %851 = vmatprep.mubr.bf16.mxu0 0
      %852 = vmatmul.mubr.bf16.gmra.mrb[0].mxu0 %v813
      %v853 = vpop.f32.mrb[0].mxu0
      %v854 = vadd.f32 %v811, %v853
      %v855 = vpop.f32.mrb[0].mxu0
      %v856 = vpop.f32.mrb[0].mxu0
      %v857 = vpop.f32.mrb[0].mxu0
      %858 = vdwg.mxu0
      %v859 = vld [vmem:[%s6] sm:$0xff]
      %v860 = vld [vmem:[%s6 + $0x8] sm:$0xf]
      %v861 = vld [vmem:[%s6 + $0xc] sm:$0xff]
      %v862 = vld [vmem:[%s6 + $0x14] sm:$0xf]
      %v863 = vld [vmem:[%s6 + $0x18] sm:$0xff]
      %v864 = vld [vmem:[%s6 + $0x20] sm:$0xf]
      %v865 = vld [vmem:[%s6 + $0x24] sm:$0xff]
      %v866 = vld [vmem:[%s6 + $0x2c] sm:$0xf]
      %v867 = vld [vmem:[%s6 + $0x30] sm:$0xff]
      %v868 = vld [vmem:[%s6 + $0x38] sm:$0xf]
      %v869 = vld [vmem:[%s6 + $0x3c] sm:$0xff]
      %v870 = vld [vmem:[%s6 + $0x44] sm:$0xf]
      %v871 = vld [vmem:[%s6 + $0x48] sm:$0xff]
      %v872 = vld [vmem:[%s6 + $0x50] sm:$0xf]
      %v873 = vld [vmem:[%s6 + $0x54] sm:$0xff]
      %v874 = vld [vmem:[%s6 + $0x5c] sm:$0xf]
      %v875 = vpack.c.bf16 %v854, %v854
      %v892 = vunpack.c.l.b16 %v859
      %v893 = vunpack.c.h.b16 %v859
      %v894 = vunpack.c.l.b16 %v860
      %v895 = vunpack.c.l.b16 %v861
      %v896 = vunpack.c.h.b16 %v861
      %v897 = vunpack.c.l.b16 %v862
      %v898 = vunpack.c.l.b16 %v863
      %v899 = vunpack.c.h.b16 %v863
      %v900 = vunpack.c.l.b16 %v864
      %v901 = vunpack.c.l.b16 %v865
      %v902 = vunpack.c.h.b16 %v865
      %v903 = vunpack.c.l.b16 %v866
      %v904 = vunpack.c.l.b16 %v867
      %v905 = vunpack.c.h.b16 %v867
      %v906 = vunpack.c.l.b16 %v868
      %v907 = vunpack.c.l.b16 %v869
      %v908 = vunpack.c.h.b16 %v869
      %v909 = vunpack.c.l.b16 %v870
      %v910 = vunpack.c.l.b16 %v871
      %v911 = vunpack.c.h.b16 %v871
      %v912 = vunpack.c.l.b16 %v872
      %v913 = vunpack.c.l.b16 %v873
      %v914 = vunpack.c.h.b16 %v873
      %v915 = vunpack.c.l.b16 %v874
      %v916 = vpack.c.b16 %v895, %v892
      %v917 = vpack.c.b16 %v896, %v893
      %v918 = vpack.c.b16 %v897, %v894
      %v919 = vpack.c.b16 %v901, %v898
      %v920 = vpack.c.b16 %v902, %v899
      %v921 = vpack.c.b16 %v903, %v900
      %v922 = vpack.c.b16 %v907, %v904
      %v923 = vpack.c.b16 %v908, %v905
      %v924 = vpack.c.b16 %v909, %v906
      %v925 = vpack.c.b16 %v913, %v910
      %v926 = vpack.c.b16 %v914, %v911
      %v927 = vpack.c.b16 %v915, %v912
      %vm940 = vcmask 523264
      %v942 = vsel %vm940, %v875, 0
      %944 = vmatprep.subr.bf16.mxu0 %v917
      %945 = vmatpush1.bf16.msra.mxu0 %v916
      %946 = vmatprep.subr.bf16.mxu0 %v920
      %947 = vmatpush1.bf16.msra.mxu0 %v919
      %948 = vmatprep.subr.bf16.mxu0 %v923
      %949 = vmatpush1.bf16.msra.mxu0 %v922
      %950 = vmatprep.subr.bf16.mxu0 %v926
      %951 = vmatpush1.bf16.msra.mxu0 %v925
      %952 = vmatprep.subr.bf16.mxu0 0
      %953 = vmatpush1.bf16.msra.mxu0 0
      %954 = vmatprep.subr.bf16.mxu0 0
      %955 = vmatpush1.bf16.msra.mxu0 0
      %956 = vmatprep.subr.bf16.mxu0 0
      %957 = vmatpush1.bf16.msra.mxu0 0
      %958 = vmatprep.subr.bf16.mxu0 0
      %959 = vmatpush1.bf16.msra.mxu0 0
      %960 = vmatprep.subr.bf16.mxu0 0
      %961 = vmatpush1.bf16.msra.mxu0 0
      %962 = vmatprep.subr.bf16.mxu0 0
      %963 = vmatpush1.bf16.msra.mxu0 0
      %964 = vmatprep.subr.bf16.mxu0 0
      %965 = vmatpush1.bf16.msra.mxu0 0
      %966 = vmatprep.subr.bf16.mxu0 0
      %967 = vmatpush1.bf16.msra.mxu0 0
      %968 = vmatprep.subr.bf16.mxu0 0
      %969 = vmatpush1.bf16.msra.mxu0 0
      %970 = vmatprep.subr.bf16.mxu0 0
      %971 = vmatpush1.bf16.msra.mxu0 0
      %972 = vmatprep.subr.bf16.mxu0 0
      %973 = vmatpush1.bf16.msra.mxu0 0
      %974 = vmatprep.subr.bf16.mxu0 0
      %975 = vmatpush1.bf16.msra.mxu0 0
      %976 = vmatprep.mubr.bf16.mxu0 0
      %977 = vmatmul.mubr.bf16.gmra.mrb[0].mxu0 %v942
      %v978 = vpop.f32.mrb[0].mxu0
      %v979 = vadd.f32 0.0, %v978
      %v980 = vpop.f32.mrb[0].mxu0
      %v981 = vadd.f32 0.0, %v980
      %v982 = vpop.f32.mrb[0].mxu0
      %v983 = vpop.f32.mrb[0].mxu0
      %984 = vdwg.mxu0
      %985 = vmatprep.subr.bf16.mxu0 0
      %986 = vmatpush1.bf16.msra.mxu0 %v918
      %987 = vmatprep.subr.bf16.mxu0 0
      %988 = vmatpush1.bf16.msra.mxu0 %v921
      %989 = vmatprep.subr.bf16.mxu0 0
      %990 = vmatpush1.bf16.msra.mxu0 %v924
      %991 = vmatprep.subr.bf16.mxu0 0
      %992 = vmatpush1.bf16.msra.mxu0 %v927
      %993 = vmatprep.subr.bf16.mxu0 0
      %994 = vmatpush1.bf16.msra.mxu0 0
      %995 = vmatprep.subr.bf16.mxu0 0
      %996 = vmatpush1.bf16.msra.mxu0 0
      %997 = vmatprep.subr.bf16.mxu0 0
      %998 = vmatpush1.bf16.msra.mxu0 0
      %999 = vmatprep.subr.bf16.mxu0 0
      %1000 = vmatpush1.bf16.msra.mxu0 0
      %1001 = vmatprep.subr.bf16.mxu0 0
      %1002 = vmatpush1.bf16.msra.mxu0 0
      %1003 = vmatprep.subr.bf16.mxu0 0
      %1004 = vmatpush1.bf16.msra.mxu0 0
      %1005 = vmatprep.subr.bf16.mxu0 0
      %1006 = vmatpush1.bf16.msra.mxu0 0
      %1007 = vmatprep.subr.bf16.mxu0 0
      %1008 = vmatpush1.bf16.msra.mxu0 0
      %1009 = vmatprep.subr.bf16.mxu0 0
      %1010 = vmatpush1.bf16.msra.mxu0 0
      %1011 = vmatprep.subr.bf16.mxu0 0
      %1012 = vmatpush1.bf16.msra.mxu0 0
      %1013 = vmatprep.subr.bf16.mxu0 0
      %1014 = vmatpush1.bf16.msra.mxu0 0
      %1015 = vmatprep.subr.bf16.mxu0 0
      %1016 = vmatpush1.bf16.msra.mxu0 0
      %1017 = vmatprep.mubr.bf16.mxu0 0
      %1018 = vmatmul.mubr.bf16.gmra.mrb[0].mxu0 %v942
      %v1019 = vpop.f32.mrb[0].mxu0
      %v1020 = vadd.f32 0.0, %v1019
      %v1021 = vpop.f32.mrb[0].mxu0
      %v1022 = vpop.f32.mrb[0].mxu0
      %v1023 = vpop.f32.mrb[0].mxu0
      %1024 = vdwg.mxu0
      %v1025 = vpack.c.bf16 %v979, %v979
      %v1026 = vpack.c.bf16 %v981, %v981
      %v1027 = vld [vmem:[%s3] sm:$0xff]
      %v1029 = vsel %vm940, %v1025, 0
      %v1032 = vsel %vm940, %v1026, 0
      %1034 = vmatprep.subr.bf16.mxu0 0
      %1035 = vmatpush1.bf16.xpose.msra.mxu0 %v1032
      %1036 = vmatprep.subr.bf16.mxu0 0
      %1037 = vmatpush1.bf16.xpose.msra.mxu0 0
      %1038 = vmatprep.subr.bf16.mxu0 0
      %1039 = vmatpush1.bf16.xpose.msra.mxu0 0
      %1040 = vmatprep.subr.bf16.mxu0 0
      %1041 = vmatpush1.bf16.xpose.msra.mxu0 0
      %1042 = vmatprep.subr.bf16.mxu0 0
      %1043 = vmatpush1.bf16.xpose.msra.mxu0 0
      %1044 = vmatprep.subr.bf16.mxu0 0
      %1045 = vmatpush1.bf16.xpose.msra.mxu0 0
      %1046 = vmatprep.subr.bf16.mxu0 0
      %1047 = vmatpush1.bf16.xpose.msra.mxu0 0
      %1048 = vmatprep.subr.bf16.mxu0 0
      %1049 = vmatpush1.bf16.xpose.msra.mxu0 0
      %1050 = vmatprep.subr.bf16.mxu0 0
      %1051 = vmatpush1.bf16.xpose.msra.mxu0 0
      %1052 = vmatprep.subr.bf16.mxu0 0
      %1053 = vmatpush1.bf16.xpose.msra.mxu0 0
      %1054 = vmatprep.subr.bf16.mxu0 0
      %1055 = vmatpush1.bf16.xpose.msra.mxu0 0
      %1056 = vmatprep.subr.bf16.mxu0 0
      %1057 = vmatpush1.bf16.xpose.msra.mxu0 0
      %1058 = vmatprep.subr.bf16.mxu0 0
      %1059 = vmatpush1.bf16.xpose.msra.mxu0 0
      %1060 = vmatprep.subr.bf16.mxu0 0
      %1061 = vmatpush1.bf16.xpose.msra.mxu0 0
      %1062 = vmatprep.subr.bf16.mxu0 0
      %1063 = vmatpush1.bf16.xpose.msra.mxu0 0
      %1064 = vmatprep.subr.bf16.mxu0 0
      %1065 = vmatpush1.bf16.xpose.msra.mxu0 0
      %1066 = vmatprep.mubr.bf16.mxu0 0
      %1067 = vmatmul.mubr.bf16.gmra.mrb[0].mxu0 %v1029
      %v1068 = vpop.f32.mrb[0].mxu0
      %v1069 = vadd.f32 %v1027, %v1068
      %v1070 = vpop.f32.mrb[0].mxu0
      %v1071 = vpop.f32.mrb[0].mxu0
      %v1072 = vpop.f32.mrb[0].mxu0
      %1073 = vdwg.mxu0
      %vm1074 = vcmask 64512
      %v1075 = vsel %vm1074, %v1069, -inf
      %1076 = vmax.xlane.f32.xlu0 %v1075
      %v1077 = vpop.xlane.xlu0 %1076
      %v1078 = vsub.f32 %v1069, %v1077
      %v1079 = vmul.f32 %v1078, 1.442695
      %v1080 = vpow.pop %v1079
      %v1081 = vsel %vm1074, %v1080, 0.0
      %1082 = vadd.xlane.f32.xlu0 %v1081
      %v1083 = vpop.xlane.xlu0 %1082
      %v1084 = vrcp.pop %v1083
      %v1085 = vmul.f32 %v1080, %v1084
      %v1086 = vpack.c.bf16 %v1085, %v1085
      %v1087 = vpack.c.bf16 %v1020, %v1020
      %v1089 = vsel %vm1074, %v1086, 0
      %vm1091 = vcmask 1043456
      %v1093 = vsel %vm1091, %v1087, 0
      %1095 = vmatprep.subr.bf16.mxu0 0
      %1096 = vmatpush1.bf16.msra.mxu0 %v1093
      %1097 = vmatprep.subr.bf16.mxu0 0
      %1098 = vmatpush1.bf16.msra.mxu0 0
      %1099 = vmatprep.subr.bf16.mxu0 0
      %1100 = vmatpush1.bf16.msra.mxu0 0
      %1101 = vmatprep.subr.bf16.mxu0 0
      %1102 = vmatpush1.bf16.msra.mxu0 0
      %1103 = vmatprep.subr.bf16.mxu0 0
      %1104 = vmatpush1.bf16.msra.mxu0 0
      %1105 = vmatprep.subr.bf16.mxu0 0
      %1106 = vmatpush1.bf16.msra.mxu0 0
      %1107 = vmatprep.subr.bf16.mxu0 0
      %1108 = vmatpush1.bf16.msra.mxu0 0
      %1109 = vmatprep.subr.bf16.mxu0 0
      %1110 = vmatpush1.bf16.msra.mxu0 0
      %1111 = vmatprep.subr.bf16.mxu0 0
      %1112 = vmatpush1.bf16.msra.mxu0 0
      %1113 = vmatprep.subr.bf16.mxu0 0
      %1114 = vmatpush1.bf16.msra.mxu0 0
      %1115 = vmatprep.subr.bf16.mxu0 0
      %1116 = vmatpush1.bf16.msra.mxu0 0
      %1117 = vmatprep.subr.bf16.mxu0 0
      %1118 = vmatpush1.bf16.msra.mxu0 0
      %1119 = vmatprep.subr.bf16.mxu0 0
      %1120 = vmatpush1.bf16.msra.mxu0 0
      %1121 = vmatprep.subr.bf16.mxu0 0
      %1122 = vmatpush1.bf16.msra.mxu0 0
      %1123 = vmatprep.subr.bf16.mxu0 0
      %1124 = vmatpush1.bf16.msra.mxu0 0
      %1125 = vmatprep.subr.bf16.mxu0 0
      %1126 = vmatpush1.bf16.msra.mxu0 0
      %1127 = vmatprep.mubr.bf16.mxu0 0
      %1128 = vmatmul.mubr.bf16.gmra.mrb[0].mxu0 %v1089
      %v1129 = vpop.f32.mrb[0].mxu0
      %v1130 = vadd.f32 0.0, %v1129
      %v1131 = vpop.f32.mrb[0].mxu0
      %v1132 = vpop.f32.mrb[0].mxu0
      %v1133 = vpop.f32.mrb[0].mxu0
      %1134 = vdwg.mxu0
      %v1135 = vld [vmem:[%s7] sm:$0xf]
      %v1136 = vld [vmem:[%s7 + $0x4] sm:$0xf]
      %v1137 = vld [vmem:[%s7 + $0x8] sm:$0xf]
      %v1138 = vld [vmem:[%s7 + $0xc] sm:$0xf]
      %v1139 = vld [vmem:[%s7 + $0x10] sm:$0xf]
      %v1140 = vld [vmem:[%s7 + $0x14] sm:$0xf]
      %v1141 = vld [vmem:[%s7 + $0x18] sm:$0xf]
      %v1142 = vld [vmem:[%s7 + $0x1c] sm:$0xf]
      %v1143 = vpack.c.bf16 %v1130, %v1130
      %v1144 = vlaneseq
      %v1145 = vshrl.u32 %v1144, 7
      %v1146 = vsub.s32 0, %v1145
      %v1147 = vrot.slane %v459, %v1146
      %v1156 = vunpack.c.l.b16 %v1135
      %v1157 = vunpack.c.l.b16 %v1136
      %v1158 = vunpack.c.l.b16 %v1137
      %v1159 = vunpack.c.l.b16 %v1138
      %v1160 = vunpack.c.l.b16 %v1139
      %v1161 = vunpack.c.l.b16 %v1140
      %v1162 = vunpack.c.l.b16 %v1141
      %v1163 = vunpack.c.l.b16 %v1142
      %v1164 = vpack.c.b16 %v1157, %v1156
      %v1165 = vpack.c.b16 %v1159, %v1158
      %v1166 = vpack.c.b16 %v1161, %v1160
      %v1167 = vpack.c.b16 %v1163, %v1162
      %v1173 = vsel %vm940, %v1143, 0
      %1175 = vmatprep.subr.bf16.mxu0 0
      %1176 = vmatpush1.bf16.msra.mxu0 %v1164
      %1177 = vmatprep.subr.bf16.mxu0 0
      %1178 = vmatpush1.bf16.msra.mxu0 %v1165
      %1179 = vmatprep.subr.bf16.mxu0 0
      %1180 = vmatpush1.bf16.msra.mxu0 %v1166
      %1181 = vmatprep.subr.bf16.mxu0 0
      %1182 = vmatpush1.bf16.msra.mxu0 %v1167
      %1183 = vmatprep.subr.bf16.mxu0 0
      %1184 = vmatpush1.bf16.msra.mxu0 0
      %1185 = vmatprep.subr.bf16.mxu0 0
      %1186 = vmatpush1.bf16.msra.mxu0 0
      %1187 = vmatprep.subr.bf16.mxu0 0
      %1188 = vmatpush1.bf16.msra.mxu0 0
      %1189 = vmatprep.subr.bf16.mxu0 0
      %1190 = vmatpush1.bf16.msra.mxu0 0
      %1191 = vmatprep.subr.bf16.mxu0 0
      %1192 = vmatpush1.bf16.msra.mxu0 0
      %1193 = vmatprep.subr.bf16.mxu0 0
      %1194 = vmatpush1.bf16.msra.mxu0 0
      %1195 = vmatprep.subr.bf16.mxu0 0
      %1196 = vmatpush1.bf16.msra.mxu0 0
      %1197 = vmatprep.subr.bf16.mxu0 0
      %1198 = vmatpush1.bf16.msra.mxu0 0
      %1199 = vmatprep.subr.bf16.mxu0 0
      %1200 = vmatpush1.bf16.msra.mxu0 0
      %1201 = vmatprep.subr.bf16.mxu0 0
      %1202 = vmatpush1.bf16.msra.mxu0 0
      %1203 = vmatprep.subr.bf16.mxu0 0
      %1204 = vmatpush1.bf16.msra.mxu0 0
      %1205 = vmatprep.subr.bf16.mxu0 0
      %1206 = vmatpush1.bf16.msra.mxu0 0
      %1207 = vmatprep.mubr.bf16.mxu0 0
      %1208 = vmatmul.mubr.bf16.gmra.mrb[0].mxu0 %v1173
      %v1209 = vpop.f32.mrb[0].mxu0
      %v1210 = vadd.f32 %v1147, %v1209
      %v1211 = vpop.f32.mrb[0].mxu0
      %v1212 = vpop.f32.mrb[0].mxu0
      %v1213 = vpop.f32.mrb[0].mxu0
      %1214 = vdwg.mxu0
      %v1215 = vadd.f32 %v854, %v1210
      %v1216 = vsel %vm940, %v1215, 0.0
      %1217 = vadd.xlane.f32.xlu0 %v1216
      %v1218 = vpop.xlane.xlu0 %1217
      %v1219 = vrcp.pop 64.0
      %v1220 = vmul.f32 %v1218, %v1219
      %v1221 = vsub.f32 %v1215, %v1220
      %v1222 = vmul.f32 %v1221, %v1221
      %v1223 = vsel %vm940, %v1222, 0.0
      %1224 = vadd.xlane.f32.xlu0 %v1223
      %v1225 = vpop.xlane.xlu0 %1224
      %v1226 = vmul.f32 %v1225, %v1219
      %v1227 = vadd.f32 %v1226, 1e-05
      %v1228 = vrsqrt.pop %v1227
      %v1229 = vmul.f32 %v1221, %v1228
      %v1230 = vlaneseq
      %v1231 = vshrl.u32 %v1230, 7
      %v1232 = vsub.s32 1, %v1231
      %v1233 = vrot.slane %v459, %v1232
      %v1234 = vmul.f32 %v1229, %v1233
      %v1235 = vlaneseq
      %v1236 = vshrl.u32 %v1235, 7
      %v1237 = vsub.s32 2, %v1236
      %v1238 = vrot.slane %v459, %v1237
      %v1239 = vadd.f32 %v1234, %v1238
      %v1240 = vld [vmem:[%s8] sm:$0xf]
      %v1241 = vld [vmem:[%s8 + $0x4] sm:$0xf]
      %v1242 = vld [vmem:[%s8 + $0x8] sm:$0xf]
      %v1243 = vld [vmem:[%s8 + $0xc] sm:$0xf]
      %v1244 = vld [vmem:[%s8 + $0x10] sm:$0xf]
      %v1245 = vld [vmem:[%s8 + $0x14] sm:$0xf]
      %v1246 = vld [vmem:[%s8 + $0x18] sm:$0xf]
      %v1247 = vld [vmem:[%s8 + $0x1c] sm:$0xf]
      %v1248 = vpack.c.bf16 %v1239, %v1239
      %v1249 = vld [vmem:[%s9] sm:$0x1]
      %v1251 = vlaneseq
      %v1252 = vshrl.u32 %v1251, 7
      %v1253 = vsub.s32 0, %v1252
      %v1254 = vrot.slane %v1249, %v1253
      %v1264 = vunpack.c.l.b16 %v1240
      %v1265 = vunpack.c.l.b16 %v1241
      %v1266 = vunpack.c.l.b16 %v1242
      %v1267 = vunpack.c.l.b16 %v1243
      %v1268 = vunpack.c.l.b16 %v1244
      %v1269 = vunpack.c.l.b16 %v1245
      %v1270 = vunpack.c.l.b16 %v1246
      %v1271 = vunpack.c.l.b16 %v1247
      %v1272 = vpack.c.b16 %v1265, %v1264
      %v1273 = vpack.c.b16 %v1267, %v1266
      %v1274 = vpack.c.b16 %v1269, %v1268
      %v1275 = vpack.c.b16 %v1271, %v1270
      %v1281 = vsel %vm940, %v1248, 0
      %1283 = vmatprep.subr.bf16.mxu0 0
      %1284 = vmatpush1.bf16.msra.mxu0 %v1272
      %1285 = vmatprep.subr.bf16.mxu0 0
      %1286 = vmatpush1.bf16.msra.mxu0 %v1273
      %1287 = vmatprep.subr.bf16.mxu0 0
      %1288 = vmatpush1.bf16.msra.mxu0 %v1274
      %1289 = vmatprep.subr.bf16.mxu0 0
      %1290 = vmatpush1.bf16.msra.mxu0 %v1275
      %1291 = vmatprep.subr.bf16.mxu0 0
      %1292 = vmatpush1.bf16.msra.mxu0 0
      %1293 = vmatprep.subr.bf16.mxu0 0
      %1294 = vmatpush1.bf16.msra.mxu0 0
      %1295 = vmatprep.subr.bf16.mxu0 0
      %1296 = vmatpush1.bf16.msra.mxu0 0
      %1297 = vmatprep.subr.bf16.mxu0 0
      %1298 = vmatpush1.bf16.msra.mxu0 0
      %1299 = vmatprep.subr.bf16.mxu0 0
      %1300 = vmatpush1.bf16.msra.mxu0 0
      %1301 = vmatprep.subr.bf16.mxu0 0
      %1302 = vmatpush1.bf16.msra.mxu0 0
      %1303 = vmatprep.subr.bf16.mxu0 0
      %1304 = vmatpush1.bf16.msra.mxu0 0
      %1305 = vmatprep.subr.bf16.mxu0 0
      %1306 = vmatpush1.bf16.msra.mxu0 0
      %1307 = vmatprep.subr.bf16.mxu0 0
      %1308 = vmatpush1.bf16.msra.mxu0 0
      %1309 = vmatprep.subr.bf16.mxu0 0
      %1310 = vmatpush1.bf16.msra.mxu0 0
      %1311 = vmatprep.subr.bf16.mxu0 0
      %1312 = vmatpush1.bf16.msra.mxu0 0
      %1313 = vmatprep.subr.bf16.mxu0 0
      %1314 = vmatpush1.bf16.msra.mxu0 0
      %1315 = vmatprep.mubr.bf16.mxu0 0
      %1316 = vmatmul.mubr.bf16.gmra.mrb[0].mxu0 %v1281
      %v1317 = vpop.f32.mrb[0].mxu0
      %v1318 = vadd.f32 %v1254, %v1317
      %v1319 = vpop.f32.mrb[0].mxu0
      %v1320 = vpop.f32.mrb[0].mxu0
      %v1321 = vpop.f32.mrb[0].mxu0
      %1322 = vdwg.mxu0
      %v1323 = vmul.f32 %v1318, 0.5
      %v1324 = vmul.f32 %v1318, 0.044715
      %v1325 = vmul.f32 %v1324, %v1318
      %v1326 = vmul.f32 %v1325, %v1318
      %v1327 = vadd.f32 %v1318, %v1326
      %v1328 = vmul.f32 %v1327, 0.7978846
      %v1329 = vtanh.pop %v1328
      %v1330 = vadd.f32 %v1329, 1.0
      %v1331 = vmul.f32 %v1323, %v1330
      %v1332 = vld [vmem:[%s10] sm:$0xf]
      %v1333 = vld [vmem:[%s10 + $0x4] sm:$0xf]
      %v1334 = vld [vmem:[%s10 + $0x8] sm:$0xf]
      %v1335 = vld [vmem:[%s10 + $0xc] sm:$0xf]
      %v1336 = vld [vmem:[%s10 + $0x10] sm:$0xf]
      %v1337 = vld [vmem:[%s10 + $0x14] sm:$0xf]
      %v1338 = vld [vmem:[%s10 + $0x18] sm:$0xf]
      %v1339 = vld [vmem:[%s10 + $0x1c] sm:$0xf]
      %v1340 = vld [vmem:[%s10 + $0x20] sm:$0xf]
      %v1341 = vld [vmem:[%s10 + $0x24] sm:$0xf]
      %v1342 = vld [vmem:[%s10 + $0x28] sm:$0xf]
      %v1343 = vld [vmem:[%s10 + $0x2c] sm:$0xf]
      %v1344 = vld [vmem:[%s10 + $0x30] sm:$0xf]
      %v1345 = vld [vmem:[%s10 + $0x34] sm:$0xf]
      %v1346 = vld [vmem:[%s10 + $0x38] sm:$0xf]
      %v1347 = vld [vmem:[%s10 + $0x3c] sm:$0xf]
      %v1348 = vpack.c.bf16 %v1331, %v1331
      %v1349 = vlaneseq
      %v1350 = vshrl.u32 %v1349, 7
      %v1351 = vsub.s32 3, %v1350
      %v1352 = vrot.slane %v459, %v1351
      %v1369 = vunpack.c.l.b16 %v1332
      %v1370 = vunpack.c.l.b16 %v1333
      %v1371 = vunpack.c.l.b16 %v1334
      %v1372 = vunpack.c.l.b16 %v1335
      %v1373 = vunpack.c.l.b16 %v1336
      %v1374 = vunpack.c.l.b16 %v1337
      %v1375 = vunpack.c.l.b16 %v1338
      %v1376 = vunpack.c.l.b16 %v1339
      %v1377 = vunpack.c.l.b16 %v1340
      %v1378 = vunpack.c.l.b16 %v1341
      %v1379 = vunpack.c.l.b16 %v1342
      %v1380 = vunpack.c.l.b16 %v1343
      %v1381 = vunpack.c.l.b16 %v1344
      %v1382 = vunpack.c.l.b16 %v1345
      %v1383 = vunpack.c.l.b16 %v1346
      %v1384 = vunpack.c.l.b16 %v1347
      %v1385 = vpack.c.b16 %v1370, %v1369
      %v1386 = vpack.c.b16 %v1372, %v1371
      %v1387 = vpack.c.b16 %v1374, %v1373
      %v1388 = vpack.c.b16 %v1376, %v1375
      %v1389 = vpack.c.b16 %v1378, %v1377
      %v1390 = vpack.c.b16 %v1380, %v1379
      %v1391 = vpack.c.b16 %v1382, %v1381
      %v1392 = vpack.c.b16 %v1384, %v1383
      %1401 = vmatprep.subr.bf16.mxu0 0
      %1402 = vmatpush1.bf16.msra.mxu0 %v1385
      %1403 = vmatprep.subr.bf16.mxu0 0
      %1404 = vmatpush1.bf16.msra.mxu0 %v1386
      %1405 = vmatprep.subr.bf16.mxu0 0
      %1406 = vmatpush1.bf16.msra.mxu0 %v1387
      %1407 = vmatprep.subr.bf16.mxu0 0
      %1408 = vmatpush1.bf16.msra.mxu0 %v1388
      %1409 = vmatprep.subr.bf16.mxu0 0
      %1410 = vmatpush1.bf16.msra.mxu0 %v1389
      %1411 = vmatprep.subr.bf16.mxu0 0
      %1412 = vmatpush1.bf16.msra.mxu0 %v1390
      %1413 = vmatprep.subr.bf16.mxu0 0
      %1414 = vmatpush1.bf16.msra.mxu0 %v1391
      %1415 = vmatprep.subr.bf16.mxu0 0
      %1416 = vmatpush1.bf16.msra.mxu0 %v1392
      %1417 = vmatprep.subr.bf16.mxu0 0
      %1418 = vmatpush1.bf16.msra.mxu0 0
      %1419 = vmatprep.subr.bf16.mxu0 0
      %1420 = vmatpush1.bf16.msra.mxu0 0
      %1421 = vmatprep.subr.bf16.mxu0 0
      %1422 = vmatpush1.bf16.msra.mxu0 0
      %1423 = vmatprep.subr.bf16.mxu0 0
      %1424 = vmatpush1.bf16.msra.mxu0 0
      %1425 = vmatprep.subr.bf16.mxu0 0
      %1426 = vmatpush1.bf16.msra.mxu0 0
      %1427 = vmatprep.subr.bf16.mxu0 0
      %1428 = vmatpush1.bf16.msra.mxu0 0
      %1429 = vmatprep.subr.bf16.mxu0 0
      %1430 = vmatpush1.bf16.msra.mxu0 0
      %1431 = vmatprep.subr.bf16.mxu0 0
      %1432 = vmatpush1.bf16.msra.mxu0 0
      %1433 = vmatprep.mubr.bf16.mxu0 0
      %1434 = vmatmul.mubr.bf16.gmra.mrb[0].mxu0 %v1348
      %v1435 = vpop.f32.mrb[0].mxu0
      %v1436 = vadd.f32 %v1352, %v1435
      %v1437 = vpop.f32.mrb[0].mxu0
      %v1438 = vpop.f32.mrb[0].mxu0
      %v1439 = vpop.f32.mrb[0].mxu0
      %1440 = vdwg.mxu0
      %v1441 = vadd.f32 %v1239, %v1436
      %v1442 = vsel %vm940, %v1441, 0.0
      %1443 = vadd.xlane.f32.xlu0 %v1442
      %v1444 = vpop.xlane.xlu0 %1443
      %v1445 = vmul.f32 %v1444, %v1219
      %v1446 = vsub.f32 %v1441, %v1445
      %v1447 = vmul.f32 %v1446, %v1446
      %v1448 = vsel %vm940, %v1447, 0.0
      %1449 = vadd.xlane.f32.xlu0 %v1448
      %v1450 = vpop.xlane.xlu0 %1449
      %v1451 = vmul.f32 %v1450, %v1219
      %v1452 = vadd.f32 %v1451, 1e-05
      %v1453 = vrsqrt.pop %v1452
      %v1454 = vmul.f32 %v1446, %v1453
      %v1455 = vlaneseq
      %v1456 = vshrl.u32 %v1455, 7
      %v1457 = vsub.s32 4, %v1456
      %v1458 = vrot.slane %v459, %v1457
      %v1459 = vmul.f32 %v1454, %v1458
      %v1460 = vlaneseq
      %v1461 = vshrl.u32 %v1460, 7
      %v1462 = vsub.s32 5, %v1461
      %v1463 = vrot.slane %v459, %v1462
      %v1464 = vadd.f32 %v1459, %v1463
      %v1465 = vld [vmem:[%s11] sm:$0xff]
      %v1466 = vld [vmem:[%s11 + $0x8] sm:$0xff]
      %v1467 = vld [vmem:[%s11 + $0x10] sm:$0xff]
      %v1468 = vld [vmem:[%s11 + $0x18] sm:$0xff]
      %v1469 = vld [vmem:[%s11 + $0x20] sm:$0xff]
      %v1470 = vld [vmem:[%s11 + $0x28] sm:$0xff]
      %v1471 = vld [vmem:[%s11 + $0x30] sm:$0xff]
      %v1472 = vld [vmem:[%s11 + $0x38] sm:$0xff]
      %v1473 = vpack.c.bf16 %v1464, %v1464
      %v1482 = vunpack.c.l.b16 %v1465
      %v1483 = vunpack.c.h.b16 %v1465
      %v1484 = vunpack.c.l.b16 %v1466
      %v1485 = vunpack.c.h.b16 %v1466
      %v1486 = vunpack.c.l.b16 %v1467
      %v1487 = vunpack.c.h.b16 %v1467
      %v1488 = vunpack.c.l.b16 %v1468
      %v1489 = vunpack.c.h.b16 %v1468
      %v1490 = vunpack.c.l.b16 %v1469
      %v1491 = vunpack.c.h.b16 %v1469
      %v1492 = vunpack.c.l.b16 %v1470
      %v1493 = vunpack.c.h.b16 %v1470
      %v1494 = vunpack.c.l.b16 %v1471
      %v1495 = vunpack.c.h.b16 %v1471
      %v1496 = vunpack.c.l.b16 %v1472
      %v1497 = vunpack.c.h.b16 %v1472
      %v1498 = vpack.c.b16 %v1484, %v1482
      %v1499 = vpack.c.b16 %v1485, %v1483
      %v1500 = vpack.c.b16 %v1488, %v1486
      %v1501 = vpack.c.b16 %v1489, %v1487
      %v1502 = vpack.c.b16 %v1492, %v1490
      %v1503 = vpack.c.b16 %v1493, %v1491
      %v1504 = vpack.c.b16 %v1496, %v1494
      %v1505 = vpack.c.b16 %v1497, %v1495
      %v1515 = vsel %vm940, %v1473, 0
      %1517 = vmatprep.subr.bf16.mxu0 %v1499
      %1518 = vmatpush1.bf16.msra.mxu0 %v1498
      %1519 = vmatprep.subr.bf16.mxu0 %v1501
      %1520 = vmatpush1.bf16.msra.mxu0 %v1500
      %1521 = vmatprep.subr.bf16.mxu0 %v1503
      %1522 = vmatpush1.bf16.msra.mxu0 %v1502
      %1523 = vmatprep.subr.bf16.mxu0 %v1505
      %1524 = vmatpush1.bf16.msra.mxu0 %v1504
      %1525 = vmatprep.subr.bf16.mxu0 0
      %1526 = vmatpush1.bf16.msra.mxu0 0
      %1527 = vmatprep.subr.bf16.mxu0 0
      %1528 = vmatpush1.bf16.msra.mxu0 0
      %1529 = vmatprep.subr.bf16.mxu0 0
      %1530 = vmatpush1.bf16.msra.mxu0 0
      %1531 = vmatprep.subr.bf16.mxu0 0
      %1532 = vmatpush1.bf16.msra.mxu0 0
      %1533 = vmatprep.subr.bf16.mxu0 0
      %1534 = vmatpush1.bf16.msra.mxu0 0
      %1535 = vmatprep.subr.bf16.mxu0 0
      %1536 = vmatpush1.bf16.msra.mxu0 0
      %1537 = vmatprep.subr.bf16.mxu0 0
      %1538 = vmatpush1.bf16.msra.mxu0 0
      %1539 = vmatprep.subr.bf16.mxu0 0
      %1540 = vmatpush1.bf16.msra.mxu0 0
      %1541 = vmatprep.subr.bf16.mxu0 0
      %1542 = vmatpush1.bf16.msra.mxu0 0
      %1543 = vmatprep.subr.bf16.mxu0 0
      %1544 = vmatpush1.bf16.msra.mxu0 0
      %1545 = vmatprep.subr.bf16.mxu0 0
      %1546 = vmatpush1.bf16.msra.mxu0 0
      %1547 = vmatprep.subr.bf16.mxu0 0
      %1548 = vmatpush1.bf16.msra.mxu0 0
      %1549 = vmatprep.mubr.bf16.mxu0 0
      %1550 = vmatmul.mubr.bf16.gmra.mrb[0].mxu0 %v1515
      %v1551 = vpop.f32.mrb[0].mxu0
      %v1552 = vadd.f32 0.0, %v1551
      %v1553 = vpop.f32.mrb[0].mxu0
      %v1554 = vadd.f32 0.0, %v1553
      %v1555 = vpop.f32.mrb[0].mxu0
      %v1556 = vpop.f32.mrb[0].mxu0
      %1557 = vdwg.mxu0
      %v1558 = vld [vmem:[%s2] sm:$0xff]
      %v1559 = vpack.c.bf16 %v1558, %v1558
      %v1560 = vpack.c.bf16 %v1552, %v1552
      %v1561 = vld [vmem:[%s4] sm:$0xff]
      %v1563 = vsel %vm940, %v1559, 0
      %v1566 = vsel %vm940, %v1560, 0
      %1568 = vmatprep.subr.bf16.mxu0 0
      %1569 = vmatpush1.bf16.xpose.msra.mxu0 %v1566
      %1570 = vmatprep.subr.bf16.mxu0 0
      %1571 = vmatpush1.bf16.xpose.msra.mxu0 0
      %1572 = vmatprep.subr.bf16.mxu0 0
      %1573 = vmatpush1.bf16.xpose.msra.mxu0 0
      %1574 = vmatprep.subr.bf16.mxu0 0
      %1575 = vmatpush1.bf16.xpose.msra.mxu0 0
      %1576 = vmatprep.subr.bf16.mxu0 0
      %1577 = vmatpush1.bf16.xpose.msra.mxu0 0
      %1578 = vmatprep.subr.bf16.mxu0 0
      %1579 = vmatpush1.bf16.xpose.msra.mxu0 0
      %1580 = vmatprep.subr.bf16.mxu0 0
      %1581 = vmatpush1.bf16.xpose.msra.mxu0 0
      %1582 = vmatprep.subr.bf16.mxu0 0
      %1583 = vmatpush1.bf16.xpose.msra.mxu0 0
      %1584 = vmatprep.subr.bf16.mxu0 0
      %1585 = vmatpush1.bf16.xpose.msra.mxu0 0
      %1586 = vmatprep.subr.bf16.mxu0 0
      %1587 = vmatpush1.bf16.xpose.msra.mxu0 0
      %1588 = vmatprep.subr.bf16.mxu0 0
      %1589 = vmatpush1.bf16.xpose.msra.mxu0 0
      %1590 = vmatprep.subr.bf16.mxu0 0
      %1591 = vmatpush1.bf16.xpose.msra.mxu0 0
      %1592 = vmatprep.subr.bf16.mxu0 0
      %1593 = vmatpush1.bf16.xpose.msra.mxu0 0
      %1594 = vmatprep.subr.bf16.mxu0 0
      %1595 = vmatpush1.bf16.xpose.msra.mxu0 0
      %1596 = vmatprep.subr.bf16.mxu0 0
      %1597 = vmatpush1.bf16.xpose.msra.mxu0 0
      %1598 = vmatprep.subr.bf16.mxu0 0
      %1599 = vmatpush1.bf16.xpose.msra.mxu0 0
      %1600 = vmatprep.mubr.bf16.mxu0 0
      %1601 = vmatmul.mubr.bf16.gmra.mrb[0].mxu0 %v1563
      %v1602 = vpop.f32.mrb[0].mxu0
      %v1603 = vadd.f32 %v1561, %v1602
      %v1604 = vpop.f32.mrb[0].mxu0
      %v1605 = vpop.f32.mrb[0].mxu0
      %v1606 = vpop.f32.mrb[0].mxu0
      %1607 = vdwg.mxu0
      %v1608 = vsel %vm1074, %v1603, -inf
      %1609 = vmax.xlane.f32.xlu0 %v1608
      %v1610 = vpop.xlane.xlu0 %1609
      %v1611 = vsub.f32 %v1603, %v1610
      %v1612 = vmul.f32 %v1611, 1.442695
      %v1613 = vpow.pop %v1612
      %v1614 = vsel %vm1074, %v1613, 0.0
      %1615 = vadd.xlane.f32.xlu0 %v1614
      %v1616 = vpop.xlane.xlu0 %1615
      %v1617 = vrcp.pop %v1616
      %v1618 = vmul.f32 %v1613, %v1617
      %v1619 = vpack.c.bf16 %v1618, %v1618
      %v1620 = vpack.c.bf16 %v1554, %v1554
      %v1622 = vsel %vm1074, %v1619, 0
      %v1625 = vsel %vm1091, %v1620, 0
      %1627 = vmatprep.subr.bf16.mxu0 0
      %1628 = vmatpush1.bf16.msra.mxu0 %v1625
      %1629 = vmatprep.subr.bf16.mxu0 0
      %1630 = vmatpush1.bf16.msra.mxu0 0
      %1631 = vmatprep.subr.bf16.mxu0 0
      %1632 = vmatpush1.bf16.msra.mxu0 0
      %1633 = vmatprep.subr.bf16.mxu0 0
      %1634 = vmatpush1.bf16.msra.mxu0 0
      %1635 = vmatprep.subr.bf16.mxu0 0
      %1636 = vmatpush1.bf16.msra.mxu0 0
      %1637 = vmatprep.subr.bf16.mxu0 0
      %1638 = vmatpush1.bf16.msra.mxu0 0
      %1639 = vmatprep.subr.bf16.mxu0 0
      %1640 = vmatpush1.bf16.msra.mxu0 0
      %1641 = vmatprep.subr.bf16.mxu0 0
      %1642 = vmatpush1.bf16.msra.mxu0 0
      %1643 = vmatprep.subr.bf16.mxu0 0
      %1644 = vmatpush1.bf16.msra.mxu0 0
      %1645 = vmatprep.subr.bf16.mxu0 0
      %1646 = vmatpush1.bf16.msra.mxu0 0
      %1647 = vmatprep.subr.bf16.mxu0 0
      %1648 = vmatpush1.bf16.msra.mxu0 0
      %1649 = vmatprep.subr.bf16.mxu0 0
      %1650 = vmatpush1.bf16.msra.mxu0 0
      %1651 = vmatprep.subr.bf16.mxu0 0
      %1652 = vmatpush1.bf16.msra.mxu0 0
      %1653 = vmatprep.subr.bf16.mxu0 0
      %1654 = vmatpush1.bf16.msra.mxu0 0
      %1655 = vmatprep.subr.bf16.mxu0 0
      %1656 = vmatpush1.bf16.msra.mxu0 0
      %1657 = vmatprep.subr.bf16.mxu0 0
      %1658 = vmatpush1.bf16.msra.mxu0 0
      %1659 = vmatprep.mubr.bf16.mxu0 0
      %1660 = vmatmul.mubr.bf16.gmra.mrb[0].mxu0 %v1622
      %v1661 = vpop.f32.mrb[0].mxu0
      %v1662 = vadd.f32 0.0, %v1661
      %v1663 = vpop.f32.mrb[0].mxu0
      %v1664 = vpop.f32.mrb[0].mxu0
      %v1665 = vpop.f32.mrb[0].mxu0
      %1666 = vdwg.mxu0
      %v1667 = vld [vmem:[%s12] sm:$0xf]
      %v1668 = vld [vmem:[%s12 + $0x4] sm:$0xf]
      %v1669 = vld [vmem:[%s12 + $0x8] sm:$0xf]
      %v1670 = vld [vmem:[%s12 + $0xc] sm:$0xf]
      %v1671 = vld [vmem:[%s12 + $0x10] sm:$0xf]
      %v1672 = vld [vmem:[%s12 + $0x14] sm:$0xf]
      %v1673 = vld [vmem:[%s12 + $0x18] sm:$0xf]
      %v1674 = vld [vmem:[%s12 + $0x1c] sm:$0xf]
      %v1675 = vpack.c.bf16 %v1662, %v1662
      %v1676 = vlaneseq
      %v1677 = vshrl.u32 %v1676, 7
      %v1678 = vsub.s32 6, %v1677
      %v1679 = vrot.slane %v459, %v1678
      %v1688 = vunpack.c.l.b16 %v1667
      %v1689 = vunpack.c.l.b16 %v1668
      %v1690 = vunpack.c.l.b16 %v1669
      %v1691 = vunpack.c.l.b16 %v1670
      %v1692 = vunpack.c.l.b16 %v1671
      %v1693 = vunpack.c.l.b16 %v1672
      %v1694 = vunpack.c.l.b16 %v1673
      %v1695 = vunpack.c.l.b16 %v1674
      %v1696 = vpack.c.b16 %v1689, %v1688
      %v1697 = vpack.c.b16 %v1691, %v1690
      %v1698 = vpack.c.b16 %v1693, %v1692
      %v1699 = vpack.c.b16 %v1695, %v1694
      %v1705 = vsel %vm940, %v1675, 0
      %1707 = vmatprep.subr.bf16.mxu0 0
      %1708 = vmatpush1.bf16.msra.mxu0 %v1696
      %1709 = vmatprep.subr.bf16.mxu0 0
      %1710 = vmatpush1.bf16.msra.mxu0 %v1697
      %1711 = vmatprep.subr.bf16.mxu0 0
      %1712 = vmatpush1.bf16.msra.mxu0 %v1698
      %1713 = vmatprep.subr.bf16.mxu0 0
      %1714 = vmatpush1.bf16.msra.mxu0 %v1699
      %1715 = vmatprep.subr.bf16.mxu0 0
      %1716 = vmatpush1.bf16.msra.mxu0 0
      %1717 = vmatprep.subr.bf16.mxu0 0
      %1718 = vmatpush1.bf16.msra.mxu0 0
      %1719 = vmatprep.subr.bf16.mxu0 0
      %1720 = vmatpush1.bf16.msra.mxu0 0
      %1721 = vmatprep.subr.bf16.mxu0 0
      %1722 = vmatpush1.bf16.msra.mxu0 0
      %1723 = vmatprep.subr.bf16.mxu0 0
      %1724 = vmatpush1.bf16.msra.mxu0 0
      %1725 = vmatprep.subr.bf16.mxu0 0
      %1726 = vmatpush1.bf16.msra.mxu0 0
      %1727 = vmatprep.subr.bf16.mxu0 0
      %1728 = vmatpush1.bf16.msra.mxu0 0
      %1729 = vmatprep.subr.bf16.mxu0 0
      %1730 = vmatpush1.bf16.msra.mxu0 0
      %1731 = vmatprep.subr.bf16.mxu0 0
      %1732 = vmatpush1.bf16.msra.mxu0 0
      %1733 = vmatprep.subr.bf16.mxu0 0
      %1734 = vmatpush1.bf16.msra.mxu0 0
      %1735 = vmatprep.subr.bf16.mxu0 0
      %1736 = vmatpush1.bf16.msra.mxu0 0
      %1737 = vmatprep.subr.bf16.mxu0 0
      %1738 = vmatpush1.bf16.msra.mxu0 0
      %1739 = vmatprep.mubr.bf16.mxu0 0
      %1740 = vmatmul.mubr.bf16.gmra.mrb[0].mxu0 %v1705
      %v1741 = vpop.f32.mrb[0].mxu0
      %v1742 = vadd.f32 %v1679, %v1741
      %v1743 = vpop.f32.mrb[0].mxu0
      %v1744 = vpop.f32.mrb[0].mxu0
      %v1745 = vpop.f32.mrb[0].mxu0
      %1746 = vdwg.mxu0
      %v1747 = vrsqrt.pop %v683
      %v1748 = vmul.f32 %v683, %v1747
      %vm1749 = vcmp.eq.f32.partialorder %v683, inf
      %v1750 = vsel %vm1749, %v683, %v1748
      %vm1751 = vcmp.eq.f32.partialorder %v683, 0.0
      %v1752 = vand.u32 %v683, 2147483648
      %v1753 = vsel %vm1751, %v1752, %v1750
      %v1754 = vmul.f32 %v1742, %v1753
      %v1755 = vadd.f32 %v1754, %v542
      %v1756 = vcombine.high %v1755, 0.0
      %v1758 = vunpack.c.l.s4 1983009808
      %v1759 = vunpack.c.0.s8 %v1758
      %v1760 = vlaneseq
      %v1761 = vshrl.u32 %v1760, 7
      %v1762 = vsub.s32 %v1759, %v1761
      %v1763 = vrot.slane %v1755, %v1762
      %v1765 = vunpack.c.l.s4 1983009808
      %v1766 = vunpack.c.0.s8 %v1765
      %v1767 = vlaneseq
      %v1768 = vshrl.u32 %v1767, 7
      %v1769 = vsub.s32 %v1766, %v1768
      %v1770 = vrot.slane %v1756, %v1769
      %v1771 = vcombine.high %v1763, 0.0
      %v1773 = vunpack.c.l.s4 1934713408
      %v1774 = vunpack.c.0.s8 %v1773
      %v1775 = vlaneseq
      %v1776 = vshrl.u32 %v1775, 7
      %v1777 = vsub.s32 %v1774, %v1776
      %v1778 = vrot.slane %v1763, %v1777
      %v1780 = vunpack.c.l.s4 1934713408
      %v1781 = vunpack.c.0.s8 %v1780
      %v1782 = vlaneseq
      %v1783 = vshrl.u32 %v1782, 7
      %v1784 = vsub.s32 %v1781, %v1783
      %v1785 = vrot.slane %v1771, %v1784
      %v1786 = vcombine.high %v1770, 0.0
      %v1788 = vunpack.c.l.s4 1934713408
      %v1789 = vunpack.c.0.s8 %v1788
      %v1790 = vlaneseq
      %v1791 = vshrl.u32 %v1790, 7
      %v1792 = vsub.s32 %v1789, %v1791
      %v1793 = vrot.slane %v1770, %v1792
      %v1795 = vunpack.c.l.s4 1934713408
      %v1796 = vunpack.c.0.s8 %v1795
      %v1797 = vlaneseq
      %v1798 = vshrl.u32 %v1797, 7
      %v1799 = vsub.s32 %v1796, %v1798
      %v1800 = vrot.slane %v1786, %v1799
      %v1801 = vcombine.high %v1778, 0.0
      %v1802 = vcombine.high %v1785, 0.0
      %v1803 = vcombine.high %v1793, 0.0
      %v1804 = vcombine.high %v1800, 0.0
      %1806 = vrot.lane.b32.xlu0 %v1801, 2
      %v1807 = vpop.permute.xlu0 %1806
      %1810 = vrot.lane.b32.xlu0 %v1785, 4
      %v1811 = vpop.permute.xlu0 %1810
      %1814 = vrot.lane.b32.xlu0 %v1802, 6
      %v1815 = vpop.permute.xlu0 %1814
      %1818 = vrot.lane.b32.xlu0 %v1793, 8
      %v1819 = vpop.permute.xlu0 %1818
      %1822 = vrot.lane.b32.xlu0 %v1803, 10
      %v1823 = vpop.permute.xlu0 %1822
      %1826 = vrot.lane.b32.xlu0 %v1800, 12
      %v1827 = vpop.permute.xlu0 %1826
      %1830 = vrot.lane.b32.xlu0 %v1804, 14
      %v1831 = vpop.permute.xlu0 %1830
      %v1833 = vsel %vm533, %v1778, %v1807
      %vm1834 = vcmask 31744
      %v1835 = vsel %vm1834, %v1833, %v1811
      %vm1836 = vcmask 48128
      %v1837 = vsel %vm1836, %v1835, %v1815
      %v1838 = vsel %vm1074, %v1837, %v1819
      %vm1839 = vcmask 80896
      %v1840 = vsel %vm1839, %v1838, %v1823
      %vm1841 = vcmask 97280
      %v1842 = vsel %vm1841, %v1840, %v1827
      %vm1843 = vcmask 113664
      %v1844 = vsel %vm1843, %v1842, %v1831
      %vm1845 = vcmask 122880
      %1846 = vst.msk [vmem:[%s457] sm:$0x1] %vm1845, %v1844
      %p1847 = scmp.lt.s32.totalorder %s25, 1
      %s1848 = scalar_select %p1847, %s25, 1
      %s1849 = scalar_lea.vmem %s14, %s1848
      // Predicated region
      $region77: #{model_wrapper_forward.1} parent=75 // pred_check
        %p1850 = pneg %p342
      $region78: #{model_wrapper_forward.1} parent=75 // pred_check_branch
        %1852 = sbr.rel (%p1850) target = $region80
      $region79: #{model_wrapper_forward.1} parent=75 // pred_region
        _
      $region80: #{model_wrapper_forward.1} parent=75 // pred_fallthru
        _
    $region76: #{model_wrapper_forward.1} parent=5 // pred_fallthru
      _
    %p1853 = scmp.le.s32.totalorder 2, %s20
    // Predicated region
    $region81: #{model_wrapper_forward.1} parent=5 // pred_check
      %p1854 = pneg %p1853
    $region82: #{model_wrapper_forward.1} parent=5 // pred_check_branch
      %1856 = sbr.rel (%p1854) target = $region84
    $region83: #{model_wrapper_forward.1} parent=5 // pred_region
      %s1857 = ssub.s32 %s20, 2
      // Predicated region
      $region85: #{model_wrapper_forward.1} parent=83 // pred_check
        %p1858 = pneg %p348
      $region86: #{model_wrapper_forward.1} parent=83 // pred_check_branch
        %1860 = sbr.rel (%p1858) target = $region88
      $region87: #{model_wrapper_forward.1} parent=83 // pred_region
        %p1861 = scmp.lt.s32.totalorder %s26, 1
        %s1862 = scalar_select %p1861, %s26, 1
        %s1863 = scalar_lea.vmem %s14, %s1862
      $region88: #{model_wrapper_forward.1} parent=83 // pred_fallthru
        _
    $region84: #{model_wrapper_forward.1} parent=5 // pred_fallthru
      _
  $region6: #{model_wrapper_forward.1} parent=0 // loop_footer
    %s24 = sadd.s32 1, %s20
  $region7: #{model_wrapper_forward.1} parent=0 // loop_footer_branch
    %19 = sbr.rel target = $region3
  $region8: #{model_wrapper_forward.1} parent=0 // loop_exit
    _

</llo_original>
